<compile_context>
chip_gen: v7x
topology: tpu7x:2x2x1
jax: 0.10.0
libtpu: 0.0.40
codegen_flags: <defaults>
</compile_context>

<pallas_src>
import jax
import jax.numpy as jnp
from jax.experimental import pallas as pl
from jax.experimental.pallas import tpu as pltpu

EPS_BN = 1e-5


def _round_up(v, m):
    return -(-v // m) * m


# ---------------------------------------------------------------------------
# Static "tall" layout: each sample occupies LP_A (stage A) / LP_B (stage B) rows,
# valid data sits at a fixed offset inside the block, remaining rows are zero guards.
# Row shifts inside a conv therefore never leak data across samples.
# ---------------------------------------------------------------------------
def _layout(L):
    assert L % 2 == 0, "input length must be even (exact MaxPool1d(2,2))"
    D0 = 12                      # input data offset inside each stage-A block (>= 7)
    L1 = L + 12                  # layer-1 / layer-2 output length (pad=7 then pad=1)
    O1 = D0 - 7                  # layer-1 output offset (= 5)
    O2 = O1 - 1                  # layer-2 output offset (= 4, even -> pool pairing aligned)
    LP_A = _round_up(O1 + L1 + 2, 8)                     # rows per sample, stage A
    LPOOL = L1 // 2              # data length after MaxPool1d(2,2) (layers 3/4)
    OP = O2 // 2                 # pooled data offset (= 2)
    O3 = OP - 1                  # layer-3 output offset (= 1)
    O4 = O3 - 1                  # layer-4 output offset (= 0)
    LP_B = _round_up(max(LP_A // 2, OP + LPOOL + 2), 8)  # rows per sample, stage B
    assert O1 >= 1 and O2 >= 0 and O2 % 2 == 0 and O3 >= 1 and O4 >= 0
    return dict(D0=D0, L1=L1, O1=O1, O2=O2, LP_A=LP_A,
                LPOOL=LPOOL, OP=OP, O3=O3, O4=O4, LP_B=LP_B)


# ---------------------------------------------------------------------------
# Pallas kernel: whole forward pass for one batch tile (everything fits in VMEM)
# ---------------------------------------------------------------------------
def _make_kernel(lay):
    LP_A, LP_B = lay["LP_A"], lay["LP_B"]
    LPOOL, O4 = lay["LPOOL"], lay["O4"]

    def kernel(x_ref, m1_ref, m2_ref, m3_ref,
               w1_ref, b1_ref, w2_ref, b2_ref,
               w3_ref, b3_ref, w4_ref, b4_ref,
               w5_ref, b5_ref, wfc_ref, bfc_ref,
               out_ref):
        f32, bf16 = jnp.float32, jnp.bfloat16
        n_a = x_ref.shape[0]
        tb = n_a // LP_A

        def shift_rows(v, k):
            # v shifted up by k rows (zero fill at the very end; those rows only ever
            # feed guard-row outputs, which are masked / never read).
            return jnp.concatenate(
                [v[k:, :], jnp.zeros((k, v.shape[1]), v.dtype)], axis=0)

        def conv3_bn_relu(v, w_ref_, b_ref_, mask):
            # Conv1d(k=3, BN folded) on the tall layout: one bf16 matmul per tap plus a
            # plain VPU sum.  The spatial shift lives on the *input* (narrow Ci lanes);
            # there is no im2col concat / reshape and no padded-input materialization.
            x0 = v.astype(bf16)
            x1 = shift_rows(v, 1).astype(bf16)
            x2 = shift_rows(v, 2).astype(bf16)
            pre = (jnp.dot(x0, w_ref_[0], preferred_element_type=f32)
                   + jnp.dot(x1, w_ref_[1], preferred_element_type=f32)
                   + jnp.dot(x2, w_ref_[2], preferred_element_type=f32)
                   + b_ref_[...])
            y = jnp.maximum(pre, 0.0)
            if mask is not None:
                y = y * mask          # zero the guard rows between samples
            return y

        x = x_ref[...]                                          # (tb*LP_A, Cin) f32
        y1 = conv3_bn_relu(x, w1_ref, b1_ref, m1_ref[...])      # (tb*LP_A, 16)
        y2 = conv3_bn_relu(y1, w2_ref, b2_ref, m2_ref[...])     # (tb*LP_A, 32)

        # --- MaxPool1d(2,2): even/odd row pairs (data offset is even by construction) ---
        c2 = y2.shape[1]
        pairs = y2.reshape(tb, LP_A // 2, 2, c2)
        pooled = jnp.maximum(pairs[:, :, 0, :], pairs[:, :, 1, :])   # (tb, LP_A//2, 32)
        pad_rows = LP_B - LP_A // 2
        if pad_rows:
            pooled = jnp.concatenate(
                [pooled, jnp.zeros((tb, pad_rows, c2), f32)], axis=1)
        x3 = pooled.reshape(tb * LP_B, c2)                           # (tb*LP_B, 32)

        y3 = conv3_bn_relu(x3, w3_ref, b3_ref, m3_ref[...])      # (tb*LP_B, 64)
        y4 = conv3_bn_relu(y3, w4_ref, b4_ref, None)             # (tb*LP_B, 128)

        # --- AdaptiveMaxPool1d(4): PyTorch rule start=floor(i*L/4), end=ceil((i+1)*L/4).
        # The 4 window maxima are concatenated along lanes at 128-aligned offsets, giving
        # the flattened (tb, 512) feature directly (flat index p*128 + c; the packed
        # layer-5 weight accounts for PyTorch's c*4 + p view order).
        h = y4.reshape(tb, LP_B, y4.shape[1])
        bins = []
        for i in range(4):
            s = O4 + (i * LPOOL) // 4
            e = O4 - (((i + 1) * LPOOL) // -4)                   # ceil
            bins.append(jnp.max(h[:, s:e, :], axis=1))           # (tb, 128)
        amp = jnp.concatenate(bins, axis=-1)                     # (tb, 512)

        # TODO(synk): attention_sa / attention_outliers class definitions are not provided;
        # SAGAN-style residual attention with gamma initialized to 0 is the identity at
        # init, so they are treated as identity here.

        # --- layer5 (spectral-norm Linear 512->256 + ReLU; Dropout=identity) and
        # --- fc (spectral-norm Linear 256->num_classes): kept in f32 (tiny, latency-bound).
        feat = jnp.maximum(
            jnp.dot(amp, w5_ref[...], preferred_element_type=f32) + b5_ref[...], 0.0)
        logits = jnp.dot(feat, wfc_ref[...], preferred_element_type=f32) + bfc_ref[...]
        out_ref[...] = logits.astype(out_ref.dtype)

    return kernel


def _choose_batch_tile(B, max_tb=256):
    # Largest multiple-of-8 divisor of B, capped, that still yields >= 2 grid steps
    # (so v7x's second TensorCore gets work).  Falls back to a single full-batch step.
    best = None
    t = 8
    while t <= min(B, max_tb):
        if B % t == 0 and B // t >= 2:
            best = t
        t += 8
    return best if best is not None else B


def cnn_openmax_forward(x_nlc, kernel_params, num_classes, batch_tile=None):
    """x_nlc: (B, L, Cin) channels-last input; returns (B, num_classes) logits."""
    B, L, Cin = x_nlc.shape
    lay = _layout(L)
    LP_A, LP_B, D0 = lay["LP_A"], lay["LP_B"], lay["D0"]
    nc_pad = _round_up(max(num_classes, 1), 128)

    tb = batch_tile if batch_tile is not None else _choose_batch_tile(B)
    assert B % tb == 0

    # Hoisted layer-1 padding: place the input at rows [D0, D0+L) of each LP_A-row block
    # (all other rows are zero guards), flattened to the lane-last tall layout.
    x_tall = jnp.zeros((B, LP_A, Cin), jnp.float32)
    x_tall = x_tall.at[:, D0:D0 + L, :].set(x_nlc.astype(jnp.float32))
    x_tall = x_tall.reshape(B * LP_A, Cin)

    # Per-block valid-row masks (force guard rows between samples to zero so the in-kernel
    # row shifts never leak data across samples).
    def block_mask(lp, lo, hi):
        r = jnp.arange(lp)[:, None]
        m = ((r >= lo) & (r < hi)).astype(jnp.float32)
        return jnp.tile(m, (B, 1))

    m1 = block_mask(LP_A, lay["O1"], lay["O1"] + lay["L1"])
    m2 = block_mask(LP_A, lay["O2"], lay["O2"] + lay["L1"])
    m3 = block_mask(LP_B, lay["O3"], lay["O3"] + lay["LPOOL"])

    vmem = pltpu.MemorySpace.VMEM
    out = pl.pallas_call(
        _make_kernel(lay),
        out_shape=jax.ShapeDtypeStruct((B, nc_pad), jnp.float32),
        grid_spec=pltpu.PrefetchScalarGridSpec(
            num_scalar_prefetch=0,
            grid=(B // tb,),
            in_specs=[
                pl.BlockSpec((tb * LP_A, Cin), lambda i: (i, 0)),
                pl.BlockSpec((tb * LP_A, 1), lambda i: (i, 0)),
                pl.BlockSpec((tb * LP_A, 1), lambda i: (i, 0)),
                pl.BlockSpec((tb * LP_B, 1), lambda i: (i, 0)),
            ] + [pl.BlockSpec(memory_space=vmem)] * len(kernel_params),
            out_specs=pl.BlockSpec((tb, nc_pad), lambda i: (i, 0)),
        ),
        compiler_params=pltpu.CompilerParams(
            dimension_semantics=("parallel",),
            vmem_limit_bytes=48 * 1024 * 1024,   # safe on v5e/v6e (128 MiB) and v7x (64 MiB)
        ),
    )(x_tall, m1, m2, m3, *kernel_params)
    return out[:, :num_classes]


# ---------------------------------------------------------------------------
# Deterministic parameter construction (glue, plain JAX)
# ---------------------------------------------------------------------------
def spectral_normalize(w, key, n_iter=50, eps=1e-12):
    # PyTorch spectral_norm: W / sigma, sigma = u^T W v from power iteration.
    u = jax.random.normal(key, (w.shape[0],), jnp.float32)
    u = u / (jnp.linalg.norm(u) + eps)
    v = None
    for _ in range(n_iter):
        v = w.T @ u
        v = v / (jnp.linalg.norm(v) + eps)
        u = w @ v
        u = u / (jnp.linalg.norm(u) + eps)
    sigma = jnp.dot(u, w @ v)
    return w / sigma


def fold_bn(w_oik, b, gamma, beta, mean, var):
    # Eval-mode BatchNorm1d folded into the preceding Conv1d (per out-channel affine).
    scale = gamma / jnp.sqrt(var + EPS_BN)
    return w_oik * scale[:, None, None], (b - mean) * scale + beta


def init_model(key, in_channel, num_classes):
    ks = jax.random.split(key, 10)

    def conv_init(k, cin, cout):
        kw, kb = jax.random.split(k)
        w = 0.1 * jax.random.normal(kw, (cout, cin, 3), jnp.float32)
        b = 0.1 * jax.random.normal(kb, (cout,), jnp.float32)
        return w, b

    w1, b1 = conv_init(ks[0], in_channel, 16)
    w2, b2 = conv_init(ks[1], 16, 32)
    w3, b3 = conv_init(ks[2], 32, 64)
    w4, b4 = conv_init(ks[3], 64, 128)

    def bn_default(c):  # PyTorch init: gamma=1, beta=0, running_mean=0, running_var=1
        return jnp.ones((c,)), jnp.zeros((c,)), jnp.zeros((c,)), jnp.ones((c,))

    w1, b1 = fold_bn(w1, b1, *bn_default(16))
    w2, b2 = fold_bn(w2, b2, *bn_default(32))
    w3, b3 = fold_bn(w3, b3, *bn_default(64))
    w4, b4 = fold_bn(w4, b4, *bn_default(128))

    w5 = 0.05 * jax.random.normal(ks[4], (256, 128 * 4), jnp.float32)
    b5 = 0.05 * jax.random.normal(ks[5], (256,), jnp.float32)
    w5 = spectral_normalize(w5, ks[6])

    wfc = 0.05 * jax.random.normal(ks[7], (num_classes, 256), jnp.float32)
    bfc = 0.05 * jax.random.normal(ks[8], (num_classes,), jnp.float32)
    wfc = spectral_normalize(wfc, ks[9])

    return dict(w1=w1, b1=b1, w2=w2, b2=b2, w3=w3, b3=b3, w4=w4, b4=b4,
                w5=w5, b5=b5, wfc=wfc, bfc=bfc)


def pack_kernel_params(p, num_classes):
    bf16, f32 = jnp.bfloat16, jnp.float32

    def pack_conv(w_oik):
        # (Co, Ci, 3) -> (3, Ci, Co): one (Ci, Co) matrix per tap, bf16 for the MXU.
        return jnp.transpose(w_oik, (2, 1, 0)).astype(bf16)

    # layer5 weight: PyTorch flatten index = c*4 + p; the kernel flattens as p*128 + c.
    w5_r = p['w5'].reshape(256, 128, 4)                                   # [o, c, p]
    w5_packed = jnp.transpose(w5_r, (2, 1, 0)).reshape(512, 256).astype(f32)

    # fc weight/bias zero-padded to 128 output lanes (lane-dense logits store).
    nc_pad = _round_up(max(num_classes, 1), 128)
    wfc = jnp.zeros((256, nc_pad), f32).at[:, :num_classes].set(p['wfc'].T.astype(f32))
    bfc = jnp.zeros((1, nc_pad), f32).at[:, :num_classes].set(p['bfc'].reshape(1, -1))

    return (
        pack_conv(p['w1']), p['b1'].reshape(1, -1).astype(f32),
        pack_conv(p['w2']), p['b2'].reshape(1, -1).astype(f32),
        pack_conv(p['w3']), p['b3'].reshape(1, -1).astype(f32),
        pack_conv(p['w4']), p['b4'].reshape(1, -1).astype(f32),
        w5_packed, p['b5'].reshape(1, -1).astype(f32),
        wfc, bfc,
    )


# ---------------------------------------------------------------------------
# Pure-JAX reference (PyTorch NCL layout, full f32) used for correctness check
# ---------------------------------------------------------------------------
def ref_forward(x_ncl, p):
    def conv_relu(x, w, b, pad):
        y = jax.lax.conv_general_dilated(
            x, w, window_strides=(1,), padding=[(pad, pad)],
            dimension_numbers=('NCH', 'OIH', 'NCH'))
        return jnp.maximum(y + b[None, :, None], 0.0)

    h = conv_relu(x_ncl, p['w1'], p['b1'], 7)
    h = conv_relu(h, p['w2'], p['b2'], 1)
    B, C, L = h.shape
    h = jnp.max(h.reshape(B, C, L // 2, 2), axis=-1)      # MaxPool1d(2,2)
    h = conv_relu(h, p['w3'], p['b3'], 1)
    h = conv_relu(h, p['w4'], p['b4'], 1)
    Lin = h.shape[-1]
    bins = []
    for i in range(4):
        s = (i * Lin) // 4
        e = -(((i + 1) * Lin) // -4)
        bins.append(jnp.max(h[:, :, s:e], axis=-1))
    h = jnp.stack(bins, axis=-1)                           # (B, 128, 4)
    feat = h.reshape(h.shape[0], -1)                       # PyTorch view order (c*4 + p)
    feat = jnp.maximum(feat @ p['w5'].T + p['b5'], 0.0)
    return feat @ p['wfc'].T + p['bfc']


if __name__ == "__main__":
    key = jax.random.PRNGKey(0)
    kx, kp = jax.random.split(key)

    B, C_in, L = 2, 7, 16          # PyTorch input: (N, C=args.input_channels, L)
    num_classes = 10

    # Data kept channels-last (NLC) upstream so the kernel needs no layout transpose;
    # the reference uses the NCL view to match PyTorch exactly.
    x_nlc = jax.random.normal(kx, (B, L, C_in), jnp.float32)
    x_ncl = jnp.transpose(x_nlc, (0, 2, 1))

    params = init_model(kp, C_in, num_classes)
    kernel_params = pack_kernel_params(params, num_classes)

    logits = cnn_openmax_forward(x_nlc, kernel_params, num_classes)
    logits = jax.block_until_ready(logits)

    ref = ref_forward(x_ncl, params)
    assert logits.shape == (B, num_classes)
    assert not bool(jnp.isnan(logits).any())
    # bf16 conv trunk (f32 accumulation, f32 FC layers) vs. the full-f32 reference.
    assert jnp.allclose(logits, ref, atol=3e-2, rtol=3e-2), (logits, ref)
    print("KERNEL_OK")
</pallas_src>

<mosaic_0001>
module attributes {stable_mosaic.version = 11 : i64} {
  func.func @kernel(%arg0: i32, %arg1: memref<80x7xf32, #tpu.memory_space<vmem>>, %arg2: memref<80x1xf32, #tpu.memory_space<vmem>>, %arg3: memref<80x1xf32, #tpu.memory_space<vmem>>, %arg4: memref<48x1xf32, #tpu.memory_space<vmem>>, %arg5: memref<3x7x16xbf16, #tpu.memory_space<vmem>>, %arg6: memref<1x16xf32, #tpu.memory_space<vmem>>, %arg7: memref<3x16x32xbf16, #tpu.memory_space<vmem>>, %arg8: memref<1x32xf32, #tpu.memory_space<vmem>>, %arg9: memref<3x32x64xbf16, #tpu.memory_space<vmem>>, %arg10: memref<1x64xf32, #tpu.memory_space<vmem>>, %arg11: memref<3x64x128xbf16, #tpu.memory_space<vmem>>, %arg12: memref<1x128xf32, #tpu.memory_space<vmem>>, %arg13: memref<512x256xf32, #tpu.memory_space<vmem>>, %arg14: memref<1x256xf32, #tpu.memory_space<vmem>>, %arg15: memref<256x128xf32, #tpu.memory_space<vmem>>, %arg16: memref<1x128xf32, #tpu.memory_space<vmem>>, %arg17: memref<2x128xf32, #tpu.memory_space<vmem>>) attributes {dimension_semantics = [#tpu.dimension_semantics<parallel>], iteration_bounds = array<i64: 1>, scalar_prefetch = 0 : i64, scratch_operands = 0 : i64, tpu.core_type = #tpu.core_type<tc>, window_params = [{transform_indices = @transform_0, window_bounds = array<i64: 80, 7>}, {transform_indices = @transform_1, window_bounds = array<i64: 80, 1>}, {transform_indices = @transform_2, window_bounds = array<i64: 80, 1>}, {transform_indices = @transform_3, window_bounds = array<i64: 48, 1>}, {pipeline_mode = #tpu.pipeline_mode<synchronous>, transform_indices = @transform_4, window_bounds = array<i64: 3, 7, 16>}, {pipeline_mode = #tpu.pipeline_mode<synchronous>, transform_indices = @transform_5, window_bounds = array<i64: 1, 16>}, {pipeline_mode = #tpu.pipeline_mode<synchronous>, transform_indices = @transform_6, window_bounds = array<i64: 3, 16, 32>}, {pipeline_mode = #tpu.pipeline_mode<synchronous>, transform_indices = @transform_7, window_bounds = array<i64: 1, 32>}, {pipeline_mode = #tpu.pipeline_mode<synchronous>, transform_indices = @transform_8, window_bounds = array<i64: 3, 32, 64>}, {pipeline_mode = #tpu.pipeline_mode<synchronous>, transform_indices = @transform_9, window_bounds = array<i64: 1, 64>}, {pipeline_mode = #tpu.pipeline_mode<synchronous>, transform_indices = @transform_10, window_bounds = array<i64: 3, 64, 128>}, {pipeline_mode = #tpu.pipeline_mode<synchronous>, transform_indices = @transform_11, window_bounds = array<i64: 1, 128>}, {pipeline_mode = #tpu.pipeline_mode<synchronous>, transform_indices = @transform_12, window_bounds = array<i64: 512, 256>}, {pipeline_mode = #tpu.pipeline_mode<synchronous>, transform_indices = @transform_13, window_bounds = array<i64: 1, 256>}, {pipeline_mode = #tpu.pipeline_mode<synchronous>, transform_indices = @transform_14, window_bounds = array<i64: 256, 128>}, {pipeline_mode = #tpu.pipeline_mode<synchronous>, transform_indices = @transform_15, window_bounds = array<i64: 1, 128>}, {transform_indices = @transform_16, window_bounds = array<i64: 2, 128>}]} {
    %c0 = arith.constant 0 : index
    %c0_0 = arith.constant 0 : index
    %0 = vector.load %arg1[%c0, %c0_0] : memref<80x7xf32, #tpu.memory_space<vmem>>, vector<80x7xf32>
    %c0_1 = arith.constant 0 : index
    %c0_2 = arith.constant 0 : index
    %1 = vector.load %arg2[%c0_1, %c0_2] : memref<80x1xf32, #tpu.memory_space<vmem>>, vector<80x1xf32>
    %2 = arith.truncf %0 : vector<80x7xf32> to vector<80x7xbf16>
    %3 = vector.extract_strided_slice %0 {offsets = [1, 0], sizes = [79, 7], strides = [1, 1]} : vector<80x7xf32> to vector<79x7xf32>
    %cst = arith.constant 0.000000e+00 : f32
    %4 = vector.broadcast %cst : f32 to vector<1x7xf32>
    %5 = tpu.concatenate %3, %4 in 0 : vector<79x7xf32>, vector<1x7xf32> -> vector<80x7xf32>
    %6 = arith.truncf %5 : vector<80x7xf32> to vector<80x7xbf16>
    %7 = vector.extract_strided_slice %0 {offsets = [2, 0], sizes = [78, 7], strides = [1, 1]} : vector<80x7xf32> to vector<78x7xf32>
    %cst_3 = arith.constant 0.000000e+00 : f32
    %8 = vector.broadcast %cst_3 : f32 to vector<2x7xf32>
    %9 = tpu.concatenate %7, %8 in 0 : vector<78x7xf32>, vector<2x7xf32> -> vector<80x7xf32>
    %10 = arith.truncf %9 : vector<80x7xf32> to vector<80x7xbf16>
    %c0_4 = arith.constant 0 : index
    %c0_5 = arith.constant 0 : index
    %c0_6 = arith.constant 0 : index
    %11 = vector.load %arg5[%c0_4, %c0_5, %c0_6] : memref<3x7x16xbf16, #tpu.memory_space<vmem>>, vector<1x7x16xbf16>
    %12 = vector.shape_cast %11 : vector<1x7x16xbf16> to vector<7x16xbf16>
    %cst_7 = arith.constant dense<0.000000e+00> : vector<80x16xf32>
    %13 = tpu.matmul %2, %12, %cst_7 {dimension_numbers = #tpu.dot_dimension_numbers<[1], [0], [0], [1], [0, 0, 1, 1], [], []>} : vector<80x7xbf16>, vector<7x16xbf16>, vector<80x16xf32> -> vector<80x16xf32>
    %c1 = arith.constant 1 : index
    %c0_8 = arith.constant 0 : index
    %c0_9 = arith.constant 0 : index
    %14 = vector.load %arg5[%c1, %c0_8, %c0_9] : memref<3x7x16xbf16, #tpu.memory_space<vmem>>, vector<1x7x16xbf16>
    %15 = vector.shape_cast %14 : vector<1x7x16xbf16> to vector<7x16xbf16>
    %cst_10 = arith.constant dense<0.000000e+00> : vector<80x16xf32>
    %16 = tpu.matmul %6, %15, %cst_10 {dimension_numbers = #tpu.dot_dimension_numbers<[1], [0], [0], [1], [0, 0, 1, 1], [], []>} : vector<80x7xbf16>, vector<7x16xbf16>, vector<80x16xf32> -> vector<80x16xf32>
    %17 = arith.addf %13, %16 : vector<80x16xf32>
    %c2 = arith.constant 2 : index
    %c0_11 = arith.constant 0 : index
    %c0_12 = arith.constant 0 : index
    %18 = vector.load %arg5[%c2, %c0_11, %c0_12] : memref<3x7x16xbf16, #tpu.memory_space<vmem>>, vector<1x7x16xbf16>
    %19 = vector.shape_cast %18 : vector<1x7x16xbf16> to vector<7x16xbf16>
    %cst_13 = arith.constant dense<0.000000e+00> : vector<80x16xf32>
    %20 = tpu.matmul %10, %19, %cst_13 {dimension_numbers = #tpu.dot_dimension_numbers<[1], [0], [0], [1], [0, 0, 1, 1], [], []>} : vector<80x7xbf16>, vector<7x16xbf16>, vector<80x16xf32> -> vector<80x16xf32>
    %21 = arith.addf %17, %20 : vector<80x16xf32>
    %c0_14 = arith.constant 0 : index
    %c0_15 = arith.constant 0 : index
    %22 = vector.load %arg6[%c0_14, %c0_15] : memref<1x16xf32, #tpu.memory_space<vmem>>, vector<1x16xf32>
    %23 = vector.broadcast %22 : vector<1x16xf32> to vector<80x16xf32>
    %24 = arith.addf %21, %23 : vector<80x16xf32>
    %cst_16 = arith.constant 0.000000e+00 : f32
    %25 = vector.broadcast %cst_16 : f32 to vector<80x16xf32>
    %26 = arith.maximumf %24, %25 : vector<80x16xf32>
    %27 = vector.broadcast %1 : vector<80x1xf32> to vector<80x16xf32>
    %28 = arith.mulf %26, %27 : vector<80x16xf32>
    %c0_17 = arith.constant 0 : index
    %c0_18 = arith.constant 0 : index
    %29 = vector.load %arg3[%c0_17, %c0_18] : memref<80x1xf32, #tpu.memory_space<vmem>>, vector<80x1xf32>
    %30 = arith.truncf %28 : vector<80x16xf32> to vector<80x16xbf16>
    %31 = vector.extract_strided_slice %28 {offsets = [1, 0], sizes = [79, 16], strides = [1, 1]} : vector<80x16xf32> to vector<79x16xf32>
    %cst_19 = arith.constant 0.000000e+00 : f32
    %32 = vector.broadcast %cst_19 : f32 to vector<1x16xf32>
    %33 = tpu.concatenate %31, %32 in 0 : vector<79x16xf32>, vector<1x16xf32> -> vector<80x16xf32>
    %34 = arith.truncf %33 : vector<80x16xf32> to vector<80x16xbf16>
    %35 = vector.extract_strided_slice %28 {offsets = [2, 0], sizes = [78, 16], strides = [1, 1]} : vector<80x16xf32> to vector<78x16xf32>
    %cst_20 = arith.constant 0.000000e+00 : f32
    %36 = vector.broadcast %cst_20 : f32 to vector<2x16xf32>
    %37 = tpu.concatenate %35, %36 in 0 : vector<78x16xf32>, vector<2x16xf32> -> vector<80x16xf32>
    %38 = arith.truncf %37 : vector<80x16xf32> to vector<80x16xbf16>
    %c0_21 = arith.constant 0 : index
    %c0_22 = arith.constant 0 : index
    %c0_23 = arith.constant 0 : index
    %39 = vector.load %arg7[%c0_21, %c0_22, %c0_23] : memref<3x16x32xbf16, #tpu.memory_space<vmem>>, vector<1x16x32xbf16>
    %40 = vector.shape_cast %39 : vector<1x16x32xbf16> to vector<16x32xbf16>
    %cst_24 = arith.constant dense<0.000000e+00> : vector<80x32xf32>
    %41 = tpu.matmul %30, %40, %cst_24 {dimension_numbers = #tpu.dot_dimension_numbers<[1], [0], [0], [1], [0, 0, 1, 1], [], []>} : vector<80x16xbf16>, vector<16x32xbf16>, vector<80x32xf32> -> vector<80x32xf32>
    %c1_25 = arith.constant 1 : index
    %c0_26 = arith.constant 0 : index
    %c0_27 = arith.constant 0 : index
    %42 = vector.load %arg7[%c1_25, %c0_26, %c0_27] : memref<3x16x32xbf16, #tpu.memory_space<vmem>>, vector<1x16x32xbf16>
    %43 = vector.shape_cast %42 : vector<1x16x32xbf16> to vector<16x32xbf16>
    %cst_28 = arith.constant dense<0.000000e+00> : vector<80x32xf32>
    %44 = tpu.matmul %34, %43, %cst_28 {dimension_numbers = #tpu.dot_dimension_numbers<[1], [0], [0], [1], [0, 0, 1, 1], [], []>} : vector<80x16xbf16>, vector<16x32xbf16>, vector<80x32xf32> -> vector<80x32xf32>
    %45 = arith.addf %41, %44 : vector<80x32xf32>
    %c2_29 = arith.constant 2 : index
    %c0_30 = arith.constant 0 : index
    %c0_31 = arith.constant 0 : index
    %46 = vector.load %arg7[%c2_29, %c0_30, %c0_31] : memref<3x16x32xbf16, #tpu.memory_space<vmem>>, vector<1x16x32xbf16>
    %47 = vector.shape_cast %46 : vector<1x16x32xbf16> to vector<16x32xbf16>
    %cst_32 = arith.constant dense<0.000000e+00> : vector<80x32xf32>
    %48 = tpu.matmul %38, %47, %cst_32 {dimension_numbers = #tpu.dot_dimension_numbers<[1], [0], [0], [1], [0, 0, 1, 1], [], []>} : vector<80x16xbf16>, vector<16x32xbf16>, vector<80x32xf32> -> vector<80x32xf32>
    %49 = arith.addf %45, %48 : vector<80x32xf32>
    %c0_33 = arith.constant 0 : index
    %c0_34 = arith.constant 0 : index
    %50 = vector.load %arg8[%c0_33, %c0_34] : memref<1x32xf32, #tpu.memory_space<vmem>>, vector<1x32xf32>
    %51 = vector.broadcast %50 : vector<1x32xf32> to vector<80x32xf32>
    %52 = arith.addf %49, %51 : vector<80x32xf32>
    %cst_35 = arith.constant 0.000000e+00 : f32
    %53 = vector.broadcast %cst_35 : f32 to vector<80x32xf32>
    %54 = arith.maximumf %52, %53 : vector<80x32xf32>
    %55 = vector.broadcast %29 : vector<80x1xf32> to vector<80x32xf32>
    %56 = arith.mulf %54, %55 : vector<80x32xf32>
    %57 = vector.shape_cast %56 : vector<80x32xf32> to vector<2x20x2x32xf32>
    %58 = vector.extract_strided_slice %57 {offsets = [0, 0, 0, 0], sizes = [2, 20, 1, 32], strides = [1, 1, 1, 1]} : vector<2x20x2x32xf32> to vector<2x20x1x32xf32>
    %59 = vector.shape_cast %58 : vector<2x20x1x32xf32> to vector<2x20x32xf32>
    %60 = vector.extract_strided_slice %57 {offsets = [0, 0, 1, 0], sizes = [2, 20, 1, 32], strides = [1, 1, 1, 1]} : vector<2x20x2x32xf32> to vector<2x20x1x32xf32>
    %61 = vector.shape_cast %60 : vector<2x20x1x32xf32> to vector<2x20x32xf32>
    %62 = arith.maximumf %59, %61 : vector<2x20x32xf32>
    %cst_36 = arith.constant 0.000000e+00 : f32
    %63 = vector.broadcast %cst_36 : f32 to vector<2x4x32xf32>
    %64 = tpu.concatenate %62, %63 in 1 : vector<2x20x32xf32>, vector<2x4x32xf32> -> vector<2x24x32xf32>
    %65 = vector.shape_cast %64 : vector<2x24x32xf32> to vector<48x32xf32>
    %c0_37 = arith.constant 0 : index
    %c0_38 = arith.constant 0 : index
    %66 = vector.load %arg4[%c0_37, %c0_38] : memref<48x1xf32, #tpu.memory_space<vmem>>, vector<48x1xf32>
    %67 = arith.truncf %65 : vector<48x32xf32> to vector<48x32xbf16>
    %68 = vector.extract_strided_slice %65 {offsets = [1, 0], sizes = [47, 32], strides = [1, 1]} : vector<48x32xf32> to vector<47x32xf32>
    %cst_39 = arith.constant 0.000000e+00 : f32
    %69 = vector.broadcast %cst_39 : f32 to vector<1x32xf32>
    %70 = tpu.concatenate %68, %69 in 0 : vector<47x32xf32>, vector<1x32xf32> -> vector<48x32xf32>
    %71 = arith.truncf %70 : vector<48x32xf32> to vector<48x32xbf16>
    %72 = vector.extract_strided_slice %65 {offsets = [2, 0], sizes = [46, 32], strides = [1, 1]} : vector<48x32xf32> to vector<46x32xf32>
    %cst_40 = arith.constant 0.000000e+00 : f32
    %73 = vector.broadcast %cst_40 : f32 to vector<2x32xf32>
    %74 = tpu.concatenate %72, %73 in 0 : vector<46x32xf32>, vector<2x32xf32> -> vector<48x32xf32>
    %75 = arith.truncf %74 : vector<48x32xf32> to vector<48x32xbf16>
    %c0_41 = arith.constant 0 : index
    %c0_42 = arith.constant 0 : index
    %c0_43 = arith.constant 0 : index
    %76 = vector.load %arg9[%c0_41, %c0_42, %c0_43] : memref<3x32x64xbf16, #tpu.memory_space<vmem>>, vector<1x32x64xbf16>
    %77 = vector.shape_cast %76 : vector<1x32x64xbf16> to vector<32x64xbf16>
    %cst_44 = arith.constant dense<0.000000e+00> : vector<48x64xf32>
    %78 = tpu.matmul %67, %77, %cst_44 {dimension_numbers = #tpu.dot_dimension_numbers<[1], [0], [0], [1], [0, 0, 1, 1], [], []>} : vector<48x32xbf16>, vector<32x64xbf16>, vector<48x64xf32> -> vector<48x64xf32>
    %c1_45 = arith.constant 1 : index
    %c0_46 = arith.constant 0 : index
    %c0_47 = arith.constant 0 : index
    %79 = vector.load %arg9[%c1_45, %c0_46, %c0_47] : memref<3x32x64xbf16, #tpu.memory_space<vmem>>, vector<1x32x64xbf16>
    %80 = vector.shape_cast %79 : vector<1x32x64xbf16> to vector<32x64xbf16>
    %cst_48 = arith.constant dense<0.000000e+00> : vector<48x64xf32>
    %81 = tpu.matmul %71, %80, %cst_48 {dimension_numbers = #tpu.dot_dimension_numbers<[1], [0], [0], [1], [0, 0, 1, 1], [], []>} : vector<48x32xbf16>, vector<32x64xbf16>, vector<48x64xf32> -> vector<48x64xf32>
    %82 = arith.addf %78, %81 : vector<48x64xf32>
    %c2_49 = arith.constant 2 : index
    %c0_50 = arith.constant 0 : index
    %c0_51 = arith.constant 0 : index
    %83 = vector.load %arg9[%c2_49, %c0_50, %c0_51] : memref<3x32x64xbf16, #tpu.memory_space<vmem>>, vector<1x32x64xbf16>
    %84 = vector.shape_cast %83 : vector<1x32x64xbf16> to vector<32x64xbf16>
    %cst_52 = arith.constant dense<0.000000e+00> : vector<48x64xf32>
    %85 = tpu.matmul %75, %84, %cst_52 {dimension_numbers = #tpu.dot_dimension_numbers<[1], [0], [0], [1], [0, 0, 1, 1], [], []>} : vector<48x32xbf16>, vector<32x64xbf16>, vector<48x64xf32> -> vector<48x64xf32>
    %86 = arith.addf %82, %85 : vector<48x64xf32>
    %c0_53 = arith.constant 0 : index
    %c0_54 = arith.constant 0 : index
    %87 = vector.load %arg10[%c0_53, %c0_54] : memref<1x64xf32, #tpu.memory_space<vmem>>, vector<1x64xf32>
    %88 = vector.broadcast %87 : vector<1x64xf32> to vector<48x64xf32>
    %89 = arith.addf %86, %88 : vector<48x64xf32>
    %cst_55 = arith.constant 0.000000e+00 : f32
    %90 = vector.broadcast %cst_55 : f32 to vector<48x64xf32>
    %91 = arith.maximumf %89, %90 : vector<48x64xf32>
    %92 = vector.broadcast %66 : vector<48x1xf32> to vector<48x64xf32>
    %93 = arith.mulf %91, %92 : vector<48x64xf32>
    %94 = arith.truncf %93 : vector<48x64xf32> to vector<48x64xbf16>
    %95 = vector.extract_strided_slice %93 {offsets = [1, 0], sizes = [47, 64], strides = [1, 1]} : vector<48x64xf32> to vector<47x64xf32>
    %cst_56 = arith.constant 0.000000e+00 : f32
    %96 = vector.broadcast %cst_56 : f32 to vector<1x64xf32>
    %97 = tpu.concatenate %95, %96 in 0 : vector<47x64xf32>, vector<1x64xf32> -> vector<48x64xf32>
    %98 = arith.truncf %97 : vector<48x64xf32> to vector<48x64xbf16>
    %99 = vector.extract_strided_slice %93 {offsets = [2, 0], sizes = [46, 64], strides = [1, 1]} : vector<48x64xf32> to vector<46x64xf32>
    %cst_57 = arith.constant 0.000000e+00 : f32
    %100 = vector.broadcast %cst_57 : f32 to vector<2x64xf32>
    %101 = tpu.concatenate %99, %100 in 0 : vector<46x64xf32>, vector<2x64xf32> -> vector<48x64xf32>
    %102 = arith.truncf %101 : vector<48x64xf32> to vector<48x64xbf16>
    %c0_58 = arith.constant 0 : index
    %c0_59 = arith.constant 0 : index
    %c0_60 = arith.constant 0 : index
    %103 = vector.load %arg11[%c0_58, %c0_59, %c0_60] : memref<3x64x128xbf16, #tpu.memory_space<vmem>>, vector<1x64x128xbf16>
    %104 = vector.shape_cast %103 : vector<1x64x128xbf16> to vector<64x128xbf16>
    %cst_61 = arith.constant dense<0.000000e+00> : vector<48x128xf32>
    %105 = tpu.matmul %94, %104, %cst_61 {dimension_numbers = #tpu.dot_dimension_numbers<[1], [0], [0], [1], [0, 0, 1, 1], [], []>} : vector<48x64xbf16>, vector<64x128xbf16>, vector<48x128xf32> -> vector<48x128xf32>
    %c1_62 = arith.constant 1 : index
    %c0_63 = arith.constant 0 : index
    %c0_64 = arith.constant 0 : index
    %106 = vector.load %arg11[%c1_62, %c0_63, %c0_64] : memref<3x64x128xbf16, #tpu.memory_space<vmem>>, vector<1x64x128xbf16>
    %107 = vector.shape_cast %106 : vector<1x64x128xbf16> to vector<64x128xbf16>
    %cst_65 = arith.constant dense<0.000000e+00> : vector<48x128xf32>
    %108 = tpu.matmul %98, %107, %cst_65 {dimension_numbers = #tpu.dot_dimension_numbers<[1], [0], [0], [1], [0, 0, 1, 1], [], []>} : vector<48x64xbf16>, vector<64x128xbf16>, vector<48x128xf32> -> vector<48x128xf32>
    %109 = arith.addf %105, %108 : vector<48x128xf32>
    %c2_66 = arith.constant 2 : index
    %c0_67 = arith.constant 0 : index
    %c0_68 = arith.constant 0 : index
    %110 = vector.load %arg11[%c2_66, %c0_67, %c0_68] : memref<3x64x128xbf16, #tpu.memory_space<vmem>>, vector<1x64x128xbf16>
    %111 = vector.shape_cast %110 : vector<1x64x128xbf16> to vector<64x128xbf16>
    %cst_69 = arith.constant dense<0.000000e+00> : vector<48x128xf32>
    %112 = tpu.matmul %102, %111, %cst_69 {dimension_numbers = #tpu.dot_dimension_numbers<[1], [0], [0], [1], [0, 0, 1, 1], [], []>} : vector<48x64xbf16>, vector<64x128xbf16>, vector<48x128xf32> -> vector<48x128xf32>
    %113 = arith.addf %109, %112 : vector<48x128xf32>
    %c0_70 = arith.constant 0 : index
    %c0_71 = arith.constant 0 : index
    %114 = vector.load %arg12[%c0_70, %c0_71] : memref<1x128xf32, #tpu.memory_space<vmem>>, vector<1x128xf32>
    %115 = vector.broadcast %114 : vector<1x128xf32> to vector<48x128xf32>
    %116 = arith.addf %113, %115 : vector<48x128xf32>
    %cst_72 = arith.constant 0.000000e+00 : f32
    %117 = vector.broadcast %cst_72 : f32 to vector<48x128xf32>
    %118 = arith.maximumf %116, %117 : vector<48x128xf32>
    %119 = vector.shape_cast %118 : vector<48x128xf32> to vector<2x24x128xf32>
    %120 = vector.extract_strided_slice %119 {offsets = [0, 0, 0], sizes = [2, 4, 128], strides = [1, 1, 1]} : vector<2x24x128xf32> to vector<2x4x128xf32>
    %cst_73 = arith.constant dense<0xFF800000> : vector<2x128xf32>
    %121 = vector.multi_reduction <maximumf>, %120, %cst_73 [1] : vector<2x4x128xf32> to vector<2x128xf32>
    %122 = vector.extract_strided_slice %119 {offsets = [0, 3, 0], sizes = [2, 4, 128], strides = [1, 1, 1]} : vector<2x24x128xf32> to vector<2x4x128xf32>
    %cst_74 = arith.constant dense<0xFF800000> : vector<2x128xf32>
    %123 = vector.multi_reduction <maximumf>, %122, %cst_74 [1] : vector<2x4x128xf32> to vector<2x128xf32>
    %124 = vector.extract_strided_slice %119 {offsets = [0, 7, 0], sizes = [2, 4, 128], strides = [1, 1, 1]} : vector<2x24x128xf32> to vector<2x4x128xf32>
    %cst_75 = arith.constant dense<0xFF800000> : vector<2x128xf32>
    %125 = vector.multi_reduction <maximumf>, %124, %cst_75 [1] : vector<2x4x128xf32> to vector<2x128xf32>
    %126 = vector.extract_strided_slice %119 {offsets = [0, 10, 0], sizes = [2, 4, 128], strides = [1, 1, 1]} : vector<2x24x128xf32> to vector<2x4x128xf32>
    %cst_76 = arith.constant dense<0xFF800000> : vector<2x128xf32>
    %127 = vector.multi_reduction <maximumf>, %126, %cst_76 [1] : vector<2x4x128xf32> to vector<2x128xf32>
    %128 = tpu.concatenate %121, %123, %125, %127 in 1 : vector<2x128xf32>, vector<2x128xf32>, vector<2x128xf32>, vector<2x128xf32> -> vector<2x512xf32>
    %c0_77 = arith.constant 0 : index
    %c0_78 = arith.constant 0 : index
    %129 = vector.load %arg13[%c0_77, %c0_78] : memref<512x256xf32, #tpu.memory_space<vmem>>, vector<512x256xf32>
    %cst_79 = arith.constant dense<0.000000e+00> : vector<2x256xf32>
    %130 = tpu.matmul %128, %129, %cst_79 {dimension_numbers = #tpu.dot_dimension_numbers<[1], [0], [0], [1], [0, 0, 1, 1], [], []>} : vector<2x512xf32>, vector<512x256xf32>, vector<2x256xf32> -> vector<2x256xf32>
    %c0_80 = arith.constant 0 : index
    %c0_81 = arith.constant 0 : index
    %131 = vector.load %arg14[%c0_80, %c0_81] : memref<1x256xf32, #tpu.memory_space<vmem>>, vector<1x256xf32>
    %132 = vector.broadcast %131 : vector<1x256xf32> to vector<2x256xf32>
    %133 = arith.addf %130, %132 : vector<2x256xf32>
    %cst_82 = arith.constant 0.000000e+00 : f32
    %134 = vector.broadcast %cst_82 : f32 to vector<2x256xf32>
    %135 = arith.maximumf %133, %134 : vector<2x256xf32>
    %c0_83 = arith.constant 0 : index
    %c0_84 = arith.constant 0 : index
    %136 = vector.load %arg15[%c0_83, %c0_84] : memref<256x128xf32, #tpu.memory_space<vmem>>, vector<256x128xf32>
    %cst_85 = arith.constant dense<0.000000e+00> : vector<2x128xf32>
    %137 = tpu.matmul %135, %136, %cst_85 {dimension_numbers = #tpu.dot_dimension_numbers<[1], [0], [0], [1], [0, 0, 1, 1], [], []>} : vector<2x256xf32>, vector<256x128xf32>, vector<2x128xf32> -> vector<2x128xf32>
    %c0_86 = arith.constant 0 : index
    %c0_87 = arith.constant 0 : index
    %138 = vector.load %arg16[%c0_86, %c0_87] : memref<1x128xf32, #tpu.memory_space<vmem>>, vector<1x128xf32>
    %139 = vector.broadcast %138 : vector<1x128xf32> to vector<2x128xf32>
    %140 = arith.addf %137, %139 : vector<2x128xf32>
    %c0_88 = arith.constant 0 : index
    %c0_89 = arith.constant 0 : index
    %141 = vector.load %arg17[%c0_88, %c0_89] : memref<2x128xf32, #tpu.memory_space<vmem>>, vector<2x128xf32>
    tpu.vector_store %arg17[%c0_88, %c0_89], %140 {strides = array<i32>} : memref<2x128xf32, #tpu.memory_space<vmem>>, vector<2x128xf32>,
    return
  }
  func.func @transform_0(%arg0: i32) -> (i32, i32) {
    %c0_i32 = arith.constant 0 : i32
    %c0_i32_0 = arith.constant 0 : i32
    return %arg0, %c0_i32 : i32, i32
  }
  func.func @transform_1(%arg0: i32) -> (i32, i32) {
    %c0_i32 = arith.constant 0 : i32
    %c0_i32_0 = arith.constant 0 : i32
    return %arg0, %c0_i32 : i32, i32
  }
  func.func @transform_2(%arg0: i32) -> (i32, i32) {
    %c0_i32 = arith.constant 0 : i32
    %c0_i32_0 = arith.constant 0 : i32
    return %arg0, %c0_i32 : i32, i32
  }
  func.func @transform_3(%arg0: i32) -> (i32, i32) {
    %c0_i32 = arith.constant 0 : i32
    %c0_i32_0 = arith.constant 0 : i32
    return %arg0, %c0_i32 : i32, i32
  }
  func.func @transform_4(%arg0: i32) -> (i32, i32, i32) {
    %c0_i32 = arith.constant 0 : i32
    %c0_i32_0 = arith.constant 0 : i32
    %c0_i32_1 = arith.constant 0 : i32
    %c0_i32_2 = arith.constant 0 : i32
    return %c0_i32, %c0_i32_0, %c0_i32_1 : i32, i32, i32
  }
  func.func @transform_5(%arg0: i32) -> (i32, i32) {
    %c0_i32 = arith.constant 0 : i32
    %c0_i32_0 = arith.constant 0 : i32
    %c0_i32_1 = arith.constant 0 : i32
    return %c0_i32, %c0_i32_0 : i32, i32
  }
  func.func @transform_6(%arg0: i32) -> (i32, i32, i32) {
    %c0_i32 = arith.constant 0 : i32
    %c0_i32_0 = arith.constant 0 : i32
    %c0_i32_1 = arith.constant 0 : i32
    %c0_i32_2 = arith.constant 0 : i32
    return %c0_i32, %c0_i32_0, %c0_i32_1 : i32, i32, i32
  }
  func.func @transform_7(%arg0: i32) -> (i32, i32) {
    %c0_i32 = arith.constant 0 : i32
    %c0_i32_0 = arith.constant 0 : i32
    %c0_i32_1 = arith.constant 0 : i32
    return %c0_i32, %c0_i32_0 : i32, i32
  }
  func.func @transform_8(%arg0: i32) -> (i32, i32, i32) {
    %c0_i32 = arith.constant 0 : i32
    %c0_i32_0 = arith.constant 0 : i32
    %c0_i32_1 = arith.constant 0 : i32
    %c0_i32_2 = arith.constant 0 : i32
    return %c0_i32, %c0_i32_0, %c0_i32_1 : i32, i32, i32
  }
  func.func @transform_9(%arg0: i32) -> (i32, i32) {
    %c0_i32 = arith.constant 0 : i32
    %c0_i32_0 = arith.constant 0 : i32
    %c0_i32_1 = arith.constant 0 : i32
    return %c0_i32, %c0_i32_0 : i32, i32
  }
  func.func @transform_10(%arg0: i32) -> (i32, i32, i32) {
    %c0_i32 = arith.constant 0 : i32
    %c0_i32_0 = arith.constant 0 : i32
    %c0_i32_1 = arith.constant 0 : i32
    %c0_i32_2 = arith.constant 0 : i32
    return %c0_i32, %c0_i32_0, %c0_i32_1 : i32, i32, i32
  }
  func.func @transform_11(%arg0: i32) -> (i32, i32) {
    %c0_i32 = arith.constant 0 : i32
    %c0_i32_0 = arith.constant 0 : i32
    %c0_i32_1 = arith.constant 0 : i32
    return %c0_i32, %c0_i32_0 : i32, i32
  }
  func.func @transform_12(%arg0: i32) -> (i32, i32) {
    %c0_i32 = arith.constant 0 : i32
    %c0_i32_0 = arith.constant 0 : i32
    %c0_i32_1 = arith.constant 0 : i32
    return %c0_i32, %c0_i32_0 : i32, i32
  }
  func.func @transform_13(%arg0: i32) -> (i32, i32) {
    %c0_i32 = arith.constant 0 : i32
    %c0_i32_0 = arith.constant 0 : i32
    %c0_i32_1 = arith.constant 0 : i32
    return %c0_i32, %c0_i32_0 : i32, i32
  }
  func.func @transform_14(%arg0: i32) -> (i32, i32) {
    %c0_i32 = arith.constant 0 : i32
    %c0_i32_0 = arith.constant 0 : i32
    %c0_i32_1 = arith.constant 0 : i32
    return %c0_i32, %c0_i32_0 : i32, i32
  }
  func.func @transform_15(%arg0: i32) -> (i32, i32) {
    %c0_i32 = arith.constant 0 : i32
    %c0_i32_0 = arith.constant 0 : i32
    %c0_i32_1 = arith.constant 0 : i32
    return %c0_i32, %c0_i32_0 : i32, i32
  }
  func.func @transform_16(%arg0: i32) -> (i32, i32) {
    %c0_i32 = arith.constant 0 : i32
    %c0_i32_0 = arith.constant 0 : i32
    return %arg0, %c0_i32 : i32, i32
  }
}

</mosaic_0001>

<llo_original>
// kernel: tpu_custom_call.1
$region0: #{tpu_custom_call.1}
  #allocation0 [shape = 'u32[]', space=smem, size = 0x4, offset = 0x4, fixed_abs, tag = 'smem constant byte address 0x4 - core index']
  #allocation1 [shape = 'u32[144,128]{1,0:T(1,128)}', space=vmem, size = 0x12000, scoped, tag = 'internal scratch']
  %s0 = inlined_call_operand.vmem [shape: f32[80,7], index: 0, kind: input, shape index: {}]
  %s1 = inlined_call_operand.vmem [shape: f32[80,1], index: 1, kind: input, shape index: {}]
  %s2 = inlined_call_operand.vmem [shape: f32[80,1], index: 2, kind: input, shape index: {}]
  %s3 = inlined_call_operand.vmem [shape: f32[48,1], index: 3, kind: input, shape index: {}]
  %s4 = inlined_call_operand.vmem [shape: bf16[3,7,16], index: 4, kind: input, shape index: {}]
  %s5 = inlined_call_operand.vmem [shape: f32[1,16], index: 5, kind: input, shape index: {}]
  %s6 = inlined_call_operand.vmem [shape: bf16[3,16,32], index: 6, kind: input, shape index: {}]
  %s7 = inlined_call_operand.vmem [shape: f32[1,32], index: 7, kind: input, shape index: {}]
  %s8 = inlined_call_operand.vmem [shape: bf16[3,32,64], index: 8, kind: input, shape index: {}]
  %s9 = inlined_call_operand.vmem [shape: f32[1,64], index: 9, kind: input, shape index: {}]
  %s10 = inlined_call_operand.hbm [shape: bf16[3,64,128], index: 10, kind: input, shape index: {}]
  %s11 = inlined_call_operand.vmem [shape: f32[1,128], index: 11, kind: input, shape index: {}]
  %s12 = inlined_call_operand.hbm [shape: f32[512,256], index: 12, kind: input, shape index: {}]
  %s13 = inlined_call_operand.vmem [shape: f32[1,256], index: 13, kind: input, shape index: {}]
  %s14 = inlined_call_operand.vmem [shape: f32[256,128], index: 14, kind: input, shape index: {}]
  %s15 = inlined_call_operand.vmem [shape: f32[1,128], index: 15, kind: input, shape index: {}]
  %s16 = inlined_call_operand.hbm [shape: f32[2,128], index: 16, kind: output, shape index: {}]
  %s17 = sld [smem:[#allocation0]]
  $region82: #{tpu_custom_call.1} parent=0
    _
  %s19 = ssub.s32 1, %s17
  %s20 = scalar_select 0, %s19, %s17
  $region1: #{tpu_custom_call.1} parent=0
    #allocation2 [shape = 'u8[49152]{0}', space=vmem, size = 0xc000, scoped, tag = 'input window, operand 10, single buffered']
    #allocation3 [shape = 's32[1]{0}', space=sflag, size = 0x4, scoped, tag = 'scoped memory for tpu_custom_call.1']
    #allocation4 [shape = 's32[1]{0}', space=sflag, size = 0x4, scoped, tag = 'scoped memory for tpu_custom_call.1']
    #allocation5 [shape = 'u8[524288]{0}', space=vmem, size = 0x80000, scoped, tag = 'input window, operand 12, single buffered']
    #allocation6 [shape = 's32[1]{0}', space=sflag, size = 0x4, scoped, tag = 'scoped memory for tpu_custom_call.1']
    #allocation7 [shape = 'u8[1024]{0}', space=vmem, size = 0x400, scoped, tag = 'output window, operand 0, single buffered']
    %21 = vsyncpa [#allocation3], 0
    %22 = vsyncpa [#allocation6], 0
    %23 = vsyncpa [#allocation4], 0
    // Predicated region
    $region2: #{tpu_custom_call.1} parent=1 // pred_check
      _
    $region3: #{tpu_custom_call.1} parent=1 // pred_check_branch
      %25 = sbr.rel (0) target = $region5
    $region4: #{tpu_custom_call.1} parent=1 // pred_region
      _
    $region5: #{tpu_custom_call.1} parent=1 // pred_fallthru
      _
    // Predicated region
    $region6: #{tpu_custom_call.1} parent=1 // pred_check
      _
    $region7: #{tpu_custom_call.1} parent=1 // pred_check_branch
      %27 = sbr.rel (0) target = $region9
    $region8: #{tpu_custom_call.1} parent=1 // pred_region
      _
    $region9: #{tpu_custom_call.1} parent=1 // pred_fallthru
      _
    // Predicated region
    $region10: #{tpu_custom_call.1} parent=1 // pred_check
      _
    $region11: #{tpu_custom_call.1} parent=1 // pred_check_branch
      %29 = sbr.rel (0) target = $region13
    $region12: #{tpu_custom_call.1} parent=1 // pred_region
      _
    $region13: #{tpu_custom_call.1} parent=1 // pred_fallthru
      _
    // Predicated region
    $region14: #{tpu_custom_call.1} parent=1 // pred_check
      _
    $region15: #{tpu_custom_call.1} parent=1 // pred_check_branch
      %31 = sbr.rel (0) target = $region17
    $region16: #{tpu_custom_call.1} parent=1 // pred_region
      _
    $region17: #{tpu_custom_call.1} parent=1 // pred_fallthru
      _
    // Predicated region
    $region18: #{tpu_custom_call.1} parent=1 // pred_check
      _
    $region19: #{tpu_custom_call.1} parent=1 // pred_check_branch
      %33 = sbr.rel (0) target = $region21
    $region20: #{tpu_custom_call.1} parent=1 // pred_region
      _
    $region21: #{tpu_custom_call.1} parent=1 // pred_fallthru
      _
    // Predicated region
    $region22: #{tpu_custom_call.1} parent=1 // pred_check
      _
    $region23: #{tpu_custom_call.1} parent=1 // pred_check_branch
      %35 = sbr.rel (0) target = $region25
    $region24: #{tpu_custom_call.1} parent=1 // pred_region
      _
    $region25: #{tpu_custom_call.1} parent=1 // pred_fallthru
      _
    // Predicated region
    $region26: #{tpu_custom_call.1} parent=1 // pred_check
      _
    $region27: #{tpu_custom_call.1} parent=1 // pred_check_branch
      %37 = sbr.rel (0) target = $region29
    $region28: #{tpu_custom_call.1} parent=1 // pred_region
      _
    $region29: #{tpu_custom_call.1} parent=1 // pred_fallthru
      _
    // Predicated region
    $region30: #{tpu_custom_call.1} parent=1 // pred_check
      _
    $region31: #{tpu_custom_call.1} parent=1 // pred_check_branch
      %39 = sbr.rel (0) target = $region33
    $region32: #{tpu_custom_call.1} parent=1 // pred_region
      _
    $region33: #{tpu_custom_call.1} parent=1 // pred_fallthru
      _
    // Predicated region
    $region34: #{tpu_custom_call.1} parent=1 // pred_check
      _
    $region35: #{tpu_custom_call.1} parent=1 // pred_check_branch
      %41 = sbr.rel (0) target = $region37
    $region36: #{tpu_custom_call.1} parent=1 // pred_region
      _
    $region37: #{tpu_custom_call.1} parent=1 // pred_fallthru
      _
    // Predicated region
    $region38: #{tpu_custom_call.1} parent=1 // pred_check
      _
    $region39: #{tpu_custom_call.1} parent=1 // pred_check_branch
      %43 = sbr.rel (0) target = $region41
    $region40: #{tpu_custom_call.1} parent=1 // pred_region
      _
    $region41: #{tpu_custom_call.1} parent=1 // pred_fallthru
      _
    // Predicated region
    $region42: #{tpu_custom_call.1} parent=1 // pred_check
      _
    $region43: #{tpu_custom_call.1} parent=1 // pred_check_branch
      %45 = sbr.rel (0) target = $region45
    $region44: #{tpu_custom_call.1} parent=1 // pred_region
      %s47 = ssub.s32 1536, 1536
      %48 = vsyncadd [#allocation3], %s47
      %s49 = sshll.u32 [#allocation2], 4
      %s50 = int_to_ptr.vmem [resolvable:$true] %s49
      %55 = dma.hbm_to_vmem [thread:$0]  %s10, 1536, %s50, [#allocation3], 64, 64, 4
    $region45: #{tpu_custom_call.1} parent=1 // pred_fallthru
      _
    // Predicated region
    $region46: #{tpu_custom_call.1} parent=1 // pred_check
      _
    $region47: #{tpu_custom_call.1} parent=1 // pred_check_branch
      %57 = sbr.rel (0) target = $region49
    $region48: #{tpu_custom_call.1} parent=1 // pred_region
      _
    $region49: #{tpu_custom_call.1} parent=1 // pred_fallthru
      _
    // Predicated region
    $region50: #{tpu_custom_call.1} parent=1 // pred_check
      _
    $region51: #{tpu_custom_call.1} parent=1 // pred_check_branch
      %59 = sbr.rel (0) target = $region53
    $region52: #{tpu_custom_call.1} parent=1 // pred_region
      %s61 = ssub.s32 16384, 16384
      %62 = vsyncadd [#allocation6], %s61
      %s63 = sshll.u32 [#allocation5], 4
      %s64 = int_to_ptr.vmem [resolvable:$true] %s63
      %69 = dma.hbm_to_vmem [thread:$0]  %s12, 16384, %s64, [#allocation6], 256, 256, 16
    $region53: #{tpu_custom_call.1} parent=1 // pred_fallthru
      _
    // Predicated region
    $region54: #{tpu_custom_call.1} parent=1 // pred_check
      _
    $region55: #{tpu_custom_call.1} parent=1 // pred_check_branch
      %71 = sbr.rel (0) target = $region57
    $region56: #{tpu_custom_call.1} parent=1 // pred_region
      _
    $region57: #{tpu_custom_call.1} parent=1 // pred_fallthru
      _
    // Predicated region
    $region58: #{tpu_custom_call.1} parent=1 // pred_check
      _
    $region59: #{tpu_custom_call.1} parent=1 // pred_check_branch
      %73 = sbr.rel (0) target = $region61
    $region60: #{tpu_custom_call.1} parent=1 // pred_region
      _
    $region61: #{tpu_custom_call.1} parent=1 // pred_fallthru
      _
    // Predicated region
    $region62: #{tpu_custom_call.1} parent=1 // pred_check
      _
    $region63: #{tpu_custom_call.1} parent=1 // pred_check_branch
      %75 = sbr.rel (0) target = $region65
    $region64: #{tpu_custom_call.1} parent=1 // pred_region
      _
    $region65: #{tpu_custom_call.1} parent=1 // pred_fallthru
      _
    // Predicated region
    $region66: #{tpu_custom_call.1} parent=1 // pred_check
      _
    $region67: #{tpu_custom_call.1} parent=1 // pred_check_branch
      %77 = sbr.rel (0) target = $region69
    $region68: #{tpu_custom_call.1} parent=1 // pred_region
      %78 = dma.done [#allocation3], 1536
    $region69: #{tpu_custom_call.1} parent=1 // pred_fallthru
      _
    // Predicated region
    $region70: #{tpu_custom_call.1} parent=1 // pred_check
      _
    $region71: #{tpu_custom_call.1} parent=1 // pred_check_branch
      %80 = sbr.rel (0) target = $region73
    $region72: #{tpu_custom_call.1} parent=1 // pred_region
      %81 = dma.done [#allocation6], 16384
    $region73: #{tpu_custom_call.1} parent=1 // pred_fallthru
      _
    %v83 = vld [vmem:[%s0] sm:$0xff]
    %v84 = vld [vmem:[%s0 + $0x8] sm:$0xff]
    %v85 = vld [vmem:[%s0 + $0x10] sm:$0xff]
    %v86 = vld [vmem:[%s0 + $0x18] sm:$0xff]
    %v87 = vld [vmem:[%s0 + $0x20] sm:$0xff]
    %v88 = vld [vmem:[%s0 + $0x28] sm:$0xff]
    %v89 = vld [vmem:[%s0 + $0x30] sm:$0xff]
    %v90 = vld [vmem:[%s0 + $0x38] sm:$0xff]
    %v91 = vld [vmem:[%s0 + $0x40] sm:$0xff]
    %v92 = vld [vmem:[%s0 + $0x48] sm:$0xff]
    %v93 = vld [vmem:[%s1] sm:$0xff]
    %v94 = vld [vmem:[%s1 + $0x8] sm:$0xff]
    %v95 = vld [vmem:[%s1 + $0x10] sm:$0xff]
    %v96 = vld [vmem:[%s1 + $0x18] sm:$0xff]
    %v97 = vld [vmem:[%s1 + $0x20] sm:$0xff]
    %v98 = vld [vmem:[%s1 + $0x28] sm:$0xff]
    %v99 = vld [vmem:[%s1 + $0x30] sm:$0xff]
    %v100 = vld [vmem:[%s1 + $0x38] sm:$0xff]
    %v101 = vld [vmem:[%s1 + $0x40] sm:$0xff]
    %v102 = vld [vmem:[%s1 + $0x48] sm:$0xff]
    %v103 = vpack.c.bf16 %v84, %v83
    %v104 = vpack.c.bf16 %v86, %v85
    %v105 = vpack.c.bf16 %v88, %v87
    %v106 = vpack.c.bf16 %v90, %v89
    %v107 = vpack.c.bf16 %v92, %v91
    %vm118 = vcmask 1046528
    %v119 = vrot.slane %v83, 1
    %v120 = vrot.slane %v84, 1
    %v121 = vsel %vm118, %v119, %v120
    %v122 = vrot.slane %v85, 1
    %v123 = vsel %vm118, %v120, %v122
    %v124 = vrot.slane %v86, 1
    %v125 = vsel %vm118, %v122, %v124
    %v126 = vrot.slane %v87, 1
    %v127 = vsel %vm118, %v124, %v126
    %v128 = vrot.slane %v88, 1
    %v129 = vsel %vm118, %v126, %v128
    %v130 = vrot.slane %v89, 1
    %v131 = vsel %vm118, %v128, %v130
    %v132 = vrot.slane %v90, 1
    %v133 = vsel %vm118, %v130, %v132
    %v134 = vrot.slane %v91, 1
    %v135 = vsel %vm118, %v132, %v134
    %v136 = vrot.slane %v92, 1
    %v137 = vsel %vm118, %v134, %v136
    %v148 = vsel %vm118, %v136, 0.0
    %v149 = vpack.c.bf16 %v123, %v121
    %v150 = vpack.c.bf16 %v127, %v125
    %v151 = vpack.c.bf16 %v131, %v129
    %v152 = vpack.c.bf16 %v135, %v133
    %v153 = vpack.c.bf16 %v148, %v137
    %vm154 = vcmask 1045504
    %v155 = vrot.slane %v83, 2
    %v156 = vrot.slane %v84, 2
    %v157 = vsel %vm154, %v155, %v156
    %v158 = vrot.slane %v85, 2
    %v159 = vsel %vm154, %v156, %v158
    %v160 = vrot.slane %v86, 2
    %v161 = vsel %vm154, %v158, %v160
    %v162 = vrot.slane %v87, 2
    %v163 = vsel %vm154, %v160, %v162
    %v164 = vrot.slane %v88, 2
    %v165 = vsel %vm154, %v162, %v164
    %v166 = vrot.slane %v89, 2
    %v167 = vsel %vm154, %v164, %v166
    %v168 = vrot.slane %v90, 2
    %v169 = vsel %vm154, %v166, %v168
    %v170 = vrot.slane %v91, 2
    %v171 = vsel %vm154, %v168, %v170
    %v172 = vrot.slane %v92, 2
    %v173 = vsel %vm154, %v170, %v172
    %v184 = vsel %vm154, %v172, 0.0
    %v185 = vpack.c.bf16 %v159, %v157
    %v186 = vpack.c.bf16 %v163, %v161
    %v187 = vpack.c.bf16 %v167, %v165
    %v188 = vpack.c.bf16 %v171, %v169
    %v189 = vpack.c.bf16 %v184, %v173
    %v190 = vld [vmem:[%s4] sm:$0xf]
    %s191 = scalar_lea.vmem %s4, 4
    %v192 = vld [vmem:[%s191] sm:$0xf]
    %vm193 = vcmask 56320
    %v195 = vsel %vm193, %v149, 0
    %v198 = vsel %vm193, %v150, 0
    %v201 = vsel %vm193, %v151, 0
    %v204 = vsel %vm193, %v152, 0
    %v207 = vsel %vm193, %v153, 0
    %vm209 = vcmask 1042432
    %vm210 = vcmask 1043456
    %v211 = vsel %vm209, 4294967295, 65535
    %v212 = vsel %vm210, %v211, 0
    %v214 = vand.u32 %v192, %v212
    %216 = vmatprep.subr.bf16.mxu0 0
    %217 = vmatpush1.bf16.msra.mxu0 %v214
    %218 = vmatprep.subr.bf16.mxu0 0
    %219 = vmatpush1.bf16.msra.mxu0 0
    %220 = vmatprep.subr.bf16.mxu0 0
    %221 = vmatpush1.bf16.msra.mxu0 0
    %222 = vmatprep.subr.bf16.mxu0 0
    %223 = vmatpush1.bf16.msra.mxu0 0
    %224 = vmatprep.subr.bf16.mxu0 0
    %225 = vmatpush1.bf16.msra.mxu0 0
    %226 = vmatprep.subr.bf16.mxu0 0
    %227 = vmatpush1.bf16.msra.mxu0 0
    %228 = vmatprep.subr.bf16.mxu0 0
    %229 = vmatpush1.bf16.msra.mxu0 0
    %230 = vmatprep.subr.bf16.mxu0 0
    %231 = vmatpush1.bf16.msra.mxu0 0
    %232 = vmatprep.subr.bf16.mxu0 0
    %233 = vmatpush1.bf16.msra.mxu0 0
    %234 = vmatprep.subr.bf16.mxu0 0
    %235 = vmatpush1.bf16.msra.mxu0 0
    %236 = vmatprep.subr.bf16.mxu0 0
    %237 = vmatpush1.bf16.msra.mxu0 0
    %238 = vmatprep.subr.bf16.mxu0 0
    %239 = vmatpush1.bf16.msra.mxu0 0
    %240 = vmatprep.subr.bf16.mxu0 0
    %241 = vmatpush1.bf16.msra.mxu0 0
    %242 = vmatprep.subr.bf16.mxu0 0
    %243 = vmatpush1.bf16.msra.mxu0 0
    %244 = vmatprep.subr.bf16.mxu0 0
    %245 = vmatpush1.bf16.msra.mxu0 0
    %246 = vmatprep.subr.bf16.mxu0 0
    %247 = vmatpush1.bf16.msra.mxu0 0
    %248 = vmatprep.mubr.bf16.mxu0 0
    %249 = vmatmul.mubr.bf16.gmra.mrb[0].mxu0 %v195
    %v250 = vpop.f32.mrb[0].mxu0
    %v251 = vadd.f32 0.0, %v250
    %v252 = vpop.f32.mrb[0].mxu0
    %v253 = vpop.f32.mrb[0].mxu0
    %v254 = vadd.f32 0.0, %v253
    %v255 = vpop.f32.mrb[0].mxu0
    %256 = vmatprep.mubr.bf16.mxu0 0
    %257 = vmatmul.mubr.bf16.gmra.mrb[0].mxu0 %v198
    %v258 = vpop.f32.mrb[0].mxu0
    %v259 = vadd.f32 0.0, %v258
    %v260 = vpop.f32.mrb[0].mxu0
    %v261 = vpop.f32.mrb[0].mxu0
    %v262 = vadd.f32 0.0, %v261
    %v263 = vpop.f32.mrb[0].mxu0
    %264 = vmatprep.mubr.bf16.mxu0 0
    %265 = vmatmul.mubr.bf16.gmra.mrb[0].mxu0 %v201
    %v266 = vpop.f32.mrb[0].mxu0
    %v267 = vadd.f32 0.0, %v266
    %v268 = vpop.f32.mrb[0].mxu0
    %v269 = vpop.f32.mrb[0].mxu0
    %v270 = vadd.f32 0.0, %v269
    %v271 = vpop.f32.mrb[0].mxu0
    %272 = vmatprep.mubr.bf16.mxu0 0
    %273 = vmatmul.mubr.bf16.gmra.mrb[0].mxu0 %v204
    %v274 = vpop.f32.mrb[0].mxu0
    %v275 = vadd.f32 0.0, %v274
    %v276 = vpop.f32.mrb[0].mxu0
    %v277 = vpop.f32.mrb[0].mxu0
    %v278 = vadd.f32 0.0, %v277
    %v279 = vpop.f32.mrb[0].mxu0
    %280 = vmatprep.mubr.bf16.mxu0 0
    %281 = vmatmul.mubr.bf16.gmra.mrb[0].mxu0 %v207
    %v282 = vpop.f32.mrb[0].mxu0
    %v283 = vadd.f32 0.0, %v282
    %v284 = vpop.f32.mrb[0].mxu0
    %v285 = vpop.f32.mrb[0].mxu0
    %v286 = vadd.f32 0.0, %v285
    %v287 = vpop.f32.mrb[0].mxu0
    %288 = vdwg.mxu0
    %v290 = vsel %vm193, %v103, 0
    %v293 = vsel %vm193, %v104, 0
    %v296 = vsel %vm193, %v105, 0
    %v299 = vsel %vm193, %v106, 0
    %v302 = vsel %vm193, %v107, 0
    %v305 = vand.u32 %v190, %v212
    %307 = vmatprep.subr.bf16.mxu0 0
    %308 = vmatpush1.bf16.msra.mxu0 %v305
    %309 = vmatprep.subr.bf16.mxu0 0
    %310 = vmatpush1.bf16.msra.mxu0 0
    %311 = vmatprep.subr.bf16.mxu0 0
    %312 = vmatpush1.bf16.msra.mxu0 0
    %313 = vmatprep.subr.bf16.mxu0 0
    %314 = vmatpush1.bf16.msra.mxu0 0
    %315 = vmatprep.subr.bf16.mxu0 0
    %316 = vmatpush1.bf16.msra.mxu0 0
    %317 = vmatprep.subr.bf16.mxu0 0
    %318 = vmatpush1.bf16.msra.mxu0 0
    %319 = vmatprep.subr.bf16.mxu0 0
    %320 = vmatpush1.bf16.msra.mxu0 0
    %321 = vmatprep.subr.bf16.mxu0 0
    %322 = vmatpush1.bf16.msra.mxu0 0
    %323 = vmatprep.subr.bf16.mxu0 0
    %324 = vmatpush1.bf16.msra.mxu0 0
    %325 = vmatprep.subr.bf16.mxu0 0
    %326 = vmatpush1.bf16.msra.mxu0 0
    %327 = vmatprep.subr.bf16.mxu0 0
    %328 = vmatpush1.bf16.msra.mxu0 0
    %329 = vmatprep.subr.bf16.mxu0 0
    %330 = vmatpush1.bf16.msra.mxu0 0
    %331 = vmatprep.subr.bf16.mxu0 0
    %332 = vmatpush1.bf16.msra.mxu0 0
    %333 = vmatprep.subr.bf16.mxu0 0
    %334 = vmatpush1.bf16.msra.mxu0 0
    %335 = vmatprep.subr.bf16.mxu0 0
    %336 = vmatpush1.bf16.msra.mxu0 0
    %337 = vmatprep.subr.bf16.mxu0 0
    %338 = vmatpush1.bf16.msra.mxu0 0
    %339 = vmatprep.mubr.bf16.mxu0 0
    %340 = vmatmul.mubr.bf16.gmra.mrb[0].mxu0 %v290
    %v341 = vpop.f32.mrb[0].mxu0
    %v342 = vadd.f32 %v251, %v341
    %v343 = vpop.f32.mrb[0].mxu0
    %v344 = vpop.f32.mrb[0].mxu0
    %v345 = vadd.f32 %v254, %v344
    %v346 = vpop.f32.mrb[0].mxu0
    %347 = vmatprep.mubr.bf16.mxu0 0
    %348 = vmatmul.mubr.bf16.gmra.mrb[0].mxu0 %v293
    %v349 = vpop.f32.mrb[0].mxu0
    %v350 = vadd.f32 %v259, %v349
    %v351 = vpop.f32.mrb[0].mxu0
    %v352 = vpop.f32.mrb[0].mxu0
    %v353 = vadd.f32 %v262, %v352
    %v354 = vpop.f32.mrb[0].mxu0
    %355 = vmatprep.mubr.bf16.mxu0 0
    %356 = vmatmul.mubr.bf16.gmra.mrb[0].mxu0 %v296
    %v357 = vpop.f32.mrb[0].mxu0
    %v358 = vadd.f32 %v267, %v357
    %v359 = vpop.f32.mrb[0].mxu0
    %v360 = vpop.f32.mrb[0].mxu0
    %v361 = vadd.f32 %v270, %v360
    %v362 = vpop.f32.mrb[0].mxu0
    %363 = vmatprep.mubr.bf16.mxu0 0
    %364 = vmatmul.mubr.bf16.gmra.mrb[0].mxu0 %v299
    %v365 = vpop.f32.mrb[0].mxu0
    %v366 = vadd.f32 %v275, %v365
    %v367 = vpop.f32.mrb[0].mxu0
    %v368 = vpop.f32.mrb[0].mxu0
    %v369 = vadd.f32 %v278, %v368
    %v370 = vpop.f32.mrb[0].mxu0
    %371 = vmatprep.mubr.bf16.mxu0 0
    %372 = vmatmul.mubr.bf16.gmra.mrb[0].mxu0 %v302
    %v373 = vpop.f32.mrb[0].mxu0
    %v374 = vadd.f32 %v283, %v373
    %v375 = vpop.f32.mrb[0].mxu0
    %v376 = vpop.f32.mrb[0].mxu0
    %v377 = vadd.f32 %v286, %v376
    %v378 = vpop.f32.mrb[0].mxu0
    %379 = vdwg.mxu0
    %s380 = scalar_lea.vmem %s4, 8
    %v381 = vld [vmem:[%s380] sm:$0xf]
    %v383 = vsel %vm193, %v185, 0
    %v386 = vsel %vm193, %v186, 0
    %v389 = vsel %vm193, %v187, 0
    %v392 = vsel %vm193, %v188, 0
    %v395 = vsel %vm193, %v189, 0
    %v398 = vand.u32 %v381, %v212
    %400 = vmatprep.subr.bf16.mxu0 0
    %401 = vmatpush1.bf16.msra.mxu0 %v398
    %402 = vmatprep.subr.bf16.mxu0 0
    %403 = vmatpush1.bf16.msra.mxu0 0
    %404 = vmatprep.subr.bf16.mxu0 0
    %405 = vmatpush1.bf16.msra.mxu0 0
    %406 = vmatprep.subr.bf16.mxu0 0
    %407 = vmatpush1.bf16.msra.mxu0 0
    %408 = vmatprep.subr.bf16.mxu0 0
    %409 = vmatpush1.bf16.msra.mxu0 0
    %410 = vmatprep.subr.bf16.mxu0 0
    %411 = vmatpush1.bf16.msra.mxu0 0
    %412 = vmatprep.subr.bf16.mxu0 0
    %413 = vmatpush1.bf16.msra.mxu0 0
    %414 = vmatprep.subr.bf16.mxu0 0
    %415 = vmatpush1.bf16.msra.mxu0 0
    %416 = vmatprep.subr.bf16.mxu0 0
    %417 = vmatpush1.bf16.msra.mxu0 0
    %418 = vmatprep.subr.bf16.mxu0 0
    %419 = vmatpush1.bf16.msra.mxu0 0
    %420 = vmatprep.subr.bf16.mxu0 0
    %421 = vmatpush1.bf16.msra.mxu0 0
    %422 = vmatprep.subr.bf16.mxu0 0
    %423 = vmatpush1.bf16.msra.mxu0 0
    %424 = vmatprep.subr.bf16.mxu0 0
    %425 = vmatpush1.bf16.msra.mxu0 0
    %426 = vmatprep.subr.bf16.mxu0 0
    %427 = vmatpush1.bf16.msra.mxu0 0
    %428 = vmatprep.subr.bf16.mxu0 0
    %429 = vmatpush1.bf16.msra.mxu0 0
    %430 = vmatprep.subr.bf16.mxu0 0
    %431 = vmatpush1.bf16.msra.mxu0 0
    %432 = vmatprep.mubr.bf16.mxu0 0
    %433 = vmatmul.mubr.bf16.gmra.mrb[0].mxu0 %v383
    %v434 = vpop.f32.mrb[0].mxu0
    %v435 = vadd.f32 0.0, %v434
    %v436 = vpop.f32.mrb[0].mxu0
    %v437 = vpop.f32.mrb[0].mxu0
    %v438 = vadd.f32 0.0, %v437
    %v439 = vpop.f32.mrb[0].mxu0
    %440 = vmatprep.mubr.bf16.mxu0 0
    %441 = vmatmul.mubr.bf16.gmra.mrb[0].mxu0 %v386
    %v442 = vpop.f32.mrb[0].mxu0
    %v443 = vadd.f32 0.0, %v442
    %v444 = vpop.f32.mrb[0].mxu0
    %v445 = vpop.f32.mrb[0].mxu0
    %v446 = vadd.f32 0.0, %v445
    %v447 = vpop.f32.mrb[0].mxu0
    %448 = vmatprep.mubr.bf16.mxu0 0
    %449 = vmatmul.mubr.bf16.gmra.mrb[0].mxu0 %v389
    %v450 = vpop.f32.mrb[0].mxu0
    %v451 = vadd.f32 0.0, %v450
    %v452 = vpop.f32.mrb[0].mxu0
    %v453 = vpop.f32.mrb[0].mxu0
    %v454 = vadd.f32 0.0, %v453
    %v455 = vpop.f32.mrb[0].mxu0
    %456 = vmatprep.mubr.bf16.mxu0 0
    %457 = vmatmul.mubr.bf16.gmra.mrb[0].mxu0 %v392
    %v458 = vpop.f32.mrb[0].mxu0
    %v459 = vadd.f32 0.0, %v458
    %v460 = vpop.f32.mrb[0].mxu0
    %v461 = vpop.f32.mrb[0].mxu0
    %v462 = vadd.f32 0.0, %v461
    %v463 = vpop.f32.mrb[0].mxu0
    %464 = vmatprep.mubr.bf16.mxu0 0
    %465 = vmatmul.mubr.bf16.gmra.mrb[0].mxu0 %v395
    %v466 = vpop.f32.mrb[0].mxu0
    %v467 = vadd.f32 0.0, %v466
    %v468 = vpop.f32.mrb[0].mxu0
    %v469 = vpop.f32.mrb[0].mxu0
    %v470 = vadd.f32 0.0, %v469
    %v471 = vpop.f32.mrb[0].mxu0
    %472 = vdwg.mxu0
    %v473 = vadd.f32 %v342, %v435
    %v474 = vadd.f32 %v345, %v438
    %v475 = vadd.f32 %v350, %v443
    %v476 = vadd.f32 %v353, %v446
    %v477 = vadd.f32 %v358, %v451
    %v478 = vadd.f32 %v361, %v454
    %v479 = vadd.f32 %v366, %v459
    %v480 = vadd.f32 %v369, %v462
    %v481 = vadd.f32 %v374, %v467
    %v482 = vadd.f32 %v377, %v470
    %v483 = vld [vmem:[%s5] sm:$0x1]
    %v485 = vlaneseq
    %v486 = vshrl.u32 %v485, 7
    %v487 = vsub.s32 0, %v486
    %v488 = vrot.slane %v483, %v487
    %v490 = vadd.f32 %v473, %v488
    %v491 = vadd.f32 %v474, %v488
    %v492 = vadd.f32 %v475, %v488
    %v493 = vadd.f32 %v476, %v488
    %v494 = vadd.f32 %v477, %v488
    %v495 = vadd.f32 %v478, %v488
    %v496 = vadd.f32 %v479, %v488
    %v497 = vadd.f32 %v480, %v488
    %v498 = vadd.f32 %v481, %v488
    %v499 = vadd.f32 %v482, %v488
    %v500 = vmax.f32 %v490, 0.0
    %v501 = vmax.f32 %v491, 0.0
    %v502 = vmax.f32 %v492, 0.0
    %v503 = vmax.f32 %v493, 0.0
    %v504 = vmax.f32 %v494, 0.0
    %v505 = vmax.f32 %v495, 0.0
    %v506 = vmax.f32 %v496, 0.0
    %v507 = vmax.f32 %v497, 0.0
    %v508 = vmax.f32 %v498, 0.0
    %v509 = vmax.f32 %v499, 0.0
    %511 = vset.pattern.permute.xlu0 0
    %512 = vperm.xlu0 %511, %v93
    %v513 = vpop.permute.xlu0 %512
    %516 = vset.pattern.permute.xlu0 0
    %517 = vperm.xlu0 %516, %v94
    %v518 = vpop.permute.xlu0 %517
    %521 = vset.pattern.permute.xlu0 0
    %522 = vperm.xlu0 %521, %v95
    %v523 = vpop.permute.xlu0 %522
    %526 = vset.pattern.permute.xlu0 0
    %527 = vperm.xlu0 %526, %v96
    %v528 = vpop.permute.xlu0 %527
    %531 = vset.pattern.permute.xlu0 0
    %532 = vperm.xlu0 %531, %v97
    %v533 = vpop.permute.xlu0 %532
    %536 = vset.pattern.permute.xlu0 0
    %537 = vperm.xlu0 %536, %v98
    %v538 = vpop.permute.xlu0 %537
    %541 = vset.pattern.permute.xlu0 0
    %542 = vperm.xlu0 %541, %v99
    %v543 = vpop.permute.xlu0 %542
    %546 = vset.pattern.permute.xlu0 0
    %547 = vperm.xlu0 %546, %v100
    %v548 = vpop.permute.xlu0 %547
    %551 = vset.pattern.permute.xlu0 0
    %552 = vperm.xlu0 %551, %v101
    %v553 = vpop.permute.xlu0 %552
    %556 = vset.pattern.permute.xlu0 0
    %557 = vperm.xlu0 %556, %v102
    %v558 = vpop.permute.xlu0 %557
    %v560 = vmul.f32 %v500, %v513
    %v561 = vmul.f32 %v501, %v518
    %v562 = vmul.f32 %v502, %v523
    %v563 = vmul.f32 %v503, %v528
    %v564 = vmul.f32 %v504, %v533
    %v565 = vmul.f32 %v505, %v538
    %v566 = vmul.f32 %v506, %v543
    %v567 = vmul.f32 %v507, %v548
    %v568 = vmul.f32 %v508, %v553
    %v569 = vmul.f32 %v509, %v558
    %v570 = vld [vmem:[%s2] sm:$0xff]
    %v571 = vld [vmem:[%s2 + $0x8] sm:$0xff]
    %v572 = vld [vmem:[%s2 + $0x10] sm:$0xff]
    %v573 = vld [vmem:[%s2 + $0x18] sm:$0xff]
    %v574 = vld [vmem:[%s2 + $0x20] sm:$0xff]
    %v575 = vld [vmem:[%s2 + $0x28] sm:$0xff]
    %v576 = vld [vmem:[%s2 + $0x30] sm:$0xff]
    %v577 = vld [vmem:[%s2 + $0x38] sm:$0xff]
    %v578 = vld [vmem:[%s2 + $0x40] sm:$0xff]
    %v579 = vld [vmem:[%s2 + $0x48] sm:$0xff]
    %v580 = vpack.c.bf16 %v561, %v560
    %v581 = vpack.c.bf16 %v563, %v562
    %v582 = vpack.c.bf16 %v565, %v564
    %v583 = vpack.c.bf16 %v567, %v566
    %v584 = vpack.c.bf16 %v569, %v568
    %v595 = vrot.slane %v560, 1
    %v596 = vrot.slane %v561, 1
    %v597 = vsel %vm118, %v595, %v596
    %v598 = vrot.slane %v562, 1
    %v599 = vsel %vm118, %v596, %v598
    %v600 = vrot.slane %v563, 1
    %v601 = vsel %vm118, %v598, %v600
    %v602 = vrot.slane %v564, 1
    %v603 = vsel %vm118, %v600, %v602
    %v604 = vrot.slane %v565, 1
    %v605 = vsel %vm118, %v602, %v604
    %v606 = vrot.slane %v566, 1
    %v607 = vsel %vm118, %v604, %v606
    %v608 = vrot.slane %v567, 1
    %v609 = vsel %vm118, %v606, %v608
    %v610 = vrot.slane %v568, 1
    %v611 = vsel %vm118, %v608, %v610
    %v612 = vrot.slane %v569, 1
    %v613 = vsel %vm118, %v610, %v612
    %v624 = vsel %vm118, %v612, 0.0
    %v625 = vpack.c.bf16 %v599, %v597
    %v626 = vpack.c.bf16 %v603, %v601
    %v627 = vpack.c.bf16 %v607, %v605
    %v628 = vpack.c.bf16 %v611, %v609
    %v629 = vpack.c.bf16 %v624, %v613
    %v630 = vrot.slane %v560, 2
    %v631 = vrot.slane %v561, 2
    %v632 = vsel %vm154, %v630, %v631
    %v633 = vrot.slane %v562, 2
    %v634 = vsel %vm154, %v631, %v633
    %v635 = vrot.slane %v563, 2
    %v636 = vsel %vm154, %v633, %v635
    %v637 = vrot.slane %v564, 2
    %v638 = vsel %vm154, %v635, %v637
    %v639 = vrot.slane %v565, 2
    %v640 = vsel %vm154, %v637, %v639
    %v641 = vrot.slane %v566, 2
    %v642 = vsel %vm154, %v639, %v641
    %v643 = vrot.slane %v567, 2
    %v644 = vsel %vm154, %v641, %v643
    %v645 = vrot.slane %v568, 2
    %v646 = vsel %vm154, %v643, %v645
    %v647 = vrot.slane %v569, 2
    %v648 = vsel %vm154, %v645, %v647
    %v659 = vsel %vm154, %v647, 0.0
    %v660 = vpack.c.bf16 %v634, %v632
    %v661 = vpack.c.bf16 %v638, %v636
    %v662 = vpack.c.bf16 %v642, %v640
    %v663 = vpack.c.bf16 %v646, %v644
    %v664 = vpack.c.bf16 %v659, %v648
    %v665 = vld [vmem:[%s6] sm:$0xf]
    %v666 = vld [vmem:[%s6 + $0x4] sm:$0xf]
    %s667 = scalar_lea.vmem %s6, 8
    %v668 = vld [vmem:[%s667] sm:$0xf]
    %v669 = vld [vmem:[%s667 + $0x4] sm:$0xf]
    %v672 = vunpack.c.l.b16 %v668
    %v673 = vunpack.c.l.b16 %v669
    %v674 = vpack.c.b16 %v673, %v672
    %vm676 = vcmask 130048
    %v678 = vsel %vm676, %v625, 0
    %v681 = vsel %vm676, %v626, 0
    %v684 = vsel %vm676, %v627, 0
    %v687 = vsel %vm676, %v628, 0
    %v690 = vsel %vm676, %v629, 0
    %692 = vmatprep.subr.bf16.mxu0 0
    %693 = vmatpush1.bf16.msra.mxu0 %v674
    %694 = vmatprep.subr.bf16.mxu0 0
    %695 = vmatpush1.bf16.msra.mxu0 0
    %696 = vmatprep.subr.bf16.mxu0 0
    %697 = vmatpush1.bf16.msra.mxu0 0
    %698 = vmatprep.subr.bf16.mxu0 0
    %699 = vmatpush1.bf16.msra.mxu0 0
    %700 = vmatprep.subr.bf16.mxu0 0
    %701 = vmatpush1.bf16.msra.mxu0 0
    %702 = vmatprep.subr.bf16.mxu0 0
    %703 = vmatpush1.bf16.msra.mxu0 0
    %704 = vmatprep.subr.bf16.mxu0 0
    %705 = vmatpush1.bf16.msra.mxu0 0
    %706 = vmatprep.subr.bf16.mxu0 0
    %707 = vmatpush1.bf16.msra.mxu0 0
    %708 = vmatprep.subr.bf16.mxu0 0
    %709 = vmatpush1.bf16.msra.mxu0 0
    %710 = vmatprep.subr.bf16.mxu0 0
    %711 = vmatpush1.bf16.msra.mxu0 0
    %712 = vmatprep.subr.bf16.mxu0 0
    %713 = vmatpush1.bf16.msra.mxu0 0
    %714 = vmatprep.subr.bf16.mxu0 0
    %715 = vmatpush1.bf16.msra.mxu0 0
    %716 = vmatprep.subr.bf16.mxu0 0
    %717 = vmatpush1.bf16.msra.mxu0 0
    %718 = vmatprep.subr.bf16.mxu0 0
    %719 = vmatpush1.bf16.msra.mxu0 0
    %720 = vmatprep.subr.bf16.mxu0 0
    %721 = vmatpush1.bf16.msra.mxu0 0
    %722 = vmatprep.subr.bf16.mxu0 0
    %723 = vmatpush1.bf16.msra.mxu0 0
    %724 = vmatprep.mubr.bf16.mxu0 0
    %725 = vmatmul.mubr.bf16.gmra.mrb[0].mxu0 %v678
    %v726 = vpop.f32.mrb[0].mxu0
    %v727 = vadd.f32 0.0, %v726
    %v728 = vpop.f32.mrb[0].mxu0
    %v729 = vpop.f32.mrb[0].mxu0
    %v730 = vadd.f32 0.0, %v729
    %v731 = vpop.f32.mrb[0].mxu0
    %732 = vmatprep.mubr.bf16.mxu0 0
    %733 = vmatmul.mubr.bf16.gmra.mrb[0].mxu0 %v681
    %v734 = vpop.f32.mrb[0].mxu0
    %v735 = vadd.f32 0.0, %v734
    %v736 = vpop.f32.mrb[0].mxu0
    %v737 = vpop.f32.mrb[0].mxu0
    %v738 = vadd.f32 0.0, %v737
    %v739 = vpop.f32.mrb[0].mxu0
    %740 = vmatprep.mubr.bf16.mxu0 0
    %741 = vmatmul.mubr.bf16.gmra.mrb[0].mxu0 %v684
    %v742 = vpop.f32.mrb[0].mxu0
    %v743 = vadd.f32 0.0, %v742
    %v744 = vpop.f32.mrb[0].mxu0
    %v745 = vpop.f32.mrb[0].mxu0
    %v746 = vadd.f32 0.0, %v745
    %v747 = vpop.f32.mrb[0].mxu0
    %748 = vmatprep.mubr.bf16.mxu0 0
    %749 = vmatmul.mubr.bf16.gmra.mrb[0].mxu0 %v687
    %v750 = vpop.f32.mrb[0].mxu0
    %v751 = vadd.f32 0.0, %v750
    %v752 = vpop.f32.mrb[0].mxu0
    %v753 = vpop.f32.mrb[0].mxu0
    %v754 = vadd.f32 0.0, %v753
    %v755 = vpop.f32.mrb[0].mxu0
    %756 = vmatprep.mubr.bf16.mxu0 0
    %757 = vmatmul.mubr.bf16.gmra.mrb[0].mxu0 %v690
    %v758 = vpop.f32.mrb[0].mxu0
    %v759 = vadd.f32 0.0, %v758
    %v760 = vpop.f32.mrb[0].mxu0
    %v761 = vpop.f32.mrb[0].mxu0
    %v762 = vadd.f32 0.0, %v761
    %v763 = vpop.f32.mrb[0].mxu0
    %764 = vdwg.mxu0
    %v767 = vunpack.c.l.b16 %v665
    %v768 = vunpack.c.l.b16 %v666
    %v769 = vpack.c.b16 %v768, %v767
    %v772 = vsel %vm676, %v580, 0
    %v775 = vsel %vm676, %v581, 0
    %v778 = vsel %vm676, %v582, 0
    %v781 = vsel %vm676, %v583, 0
    %v784 = vsel %vm676, %v584, 0
    %786 = vmatprep.subr.bf16.mxu0 0
    %787 = vmatpush1.bf16.msra.mxu0 %v769
    %788 = vmatprep.subr.bf16.mxu0 0
    %789 = vmatpush1.bf16.msra.mxu0 0
    %790 = vmatprep.subr.bf16.mxu0 0
    %791 = vmatpush1.bf16.msra.mxu0 0
    %792 = vmatprep.subr.bf16.mxu0 0
    %793 = vmatpush1.bf16.msra.mxu0 0
    %794 = vmatprep.subr.bf16.mxu0 0
    %795 = vmatpush1.bf16.msra.mxu0 0
    %796 = vmatprep.subr.bf16.mxu0 0
    %797 = vmatpush1.bf16.msra.mxu0 0
    %798 = vmatprep.subr.bf16.mxu0 0
    %799 = vmatpush1.bf16.msra.mxu0 0
    %800 = vmatprep.subr.bf16.mxu0 0
    %801 = vmatpush1.bf16.msra.mxu0 0
    %802 = vmatprep.subr.bf16.mxu0 0
    %803 = vmatpush1.bf16.msra.mxu0 0
    %804 = vmatprep.subr.bf16.mxu0 0
    %805 = vmatpush1.bf16.msra.mxu0 0
    %806 = vmatprep.subr.bf16.mxu0 0
    %807 = vmatpush1.bf16.msra.mxu0 0
    %808 = vmatprep.subr.bf16.mxu0 0
    %809 = vmatpush1.bf16.msra.mxu0 0
    %810 = vmatprep.subr.bf16.mxu0 0
    %811 = vmatpush1.bf16.msra.mxu0 0
    %812 = vmatprep.subr.bf16.mxu0 0
    %813 = vmatpush1.bf16.msra.mxu0 0
    %814 = vmatprep.subr.bf16.mxu0 0
    %815 = vmatpush1.bf16.msra.mxu0 0
    %816 = vmatprep.subr.bf16.mxu0 0
    %817 = vmatpush1.bf16.msra.mxu0 0
    %818 = vmatprep.mubr.bf16.mxu0 0
    %819 = vmatmul.mubr.bf16.gmra.mrb[0].mxu0 %v772
    %v820 = vpop.f32.mrb[0].mxu0
    %v821 = vadd.f32 %v727, %v820
    %v822 = vpop.f32.mrb[0].mxu0
    %v823 = vpop.f32.mrb[0].mxu0
    %v824 = vadd.f32 %v730, %v823
    %v825 = vpop.f32.mrb[0].mxu0
    %826 = vmatprep.mubr.bf16.mxu0 0
    %827 = vmatmul.mubr.bf16.gmra.mrb[0].mxu0 %v775
    %v828 = vpop.f32.mrb[0].mxu0
    %v829 = vadd.f32 %v735, %v828
    %v830 = vpop.f32.mrb[0].mxu0
    %v831 = vpop.f32.mrb[0].mxu0
    %v832 = vadd.f32 %v738, %v831
    %v833 = vpop.f32.mrb[0].mxu0
    %834 = vmatprep.mubr.bf16.mxu0 0
    %835 = vmatmul.mubr.bf16.gmra.mrb[0].mxu0 %v778
    %v836 = vpop.f32.mrb[0].mxu0
    %v837 = vadd.f32 %v743, %v836
    %v838 = vpop.f32.mrb[0].mxu0
    %v839 = vpop.f32.mrb[0].mxu0
    %v840 = vadd.f32 %v746, %v839
    %v841 = vpop.f32.mrb[0].mxu0
    %842 = vmatprep.mubr.bf16.mxu0 0
    %843 = vmatmul.mubr.bf16.gmra.mrb[0].mxu0 %v781
    %v844 = vpop.f32.mrb[0].mxu0
    %v845 = vadd.f32 %v751, %v844
    %v846 = vpop.f32.mrb[0].mxu0
    %v847 = vpop.f32.mrb[0].mxu0
    %v848 = vadd.f32 %v754, %v847
    %v849 = vpop.f32.mrb[0].mxu0
    %850 = vmatprep.mubr.bf16.mxu0 0
    %851 = vmatmul.mubr.bf16.gmra.mrb[0].mxu0 %v784
    %v852 = vpop.f32.mrb[0].mxu0
    %v853 = vadd.f32 %v759, %v852
    %v854 = vpop.f32.mrb[0].mxu0
    %v855 = vpop.f32.mrb[0].mxu0
    %v856 = vadd.f32 %v762, %v855
    %v857 = vpop.f32.mrb[0].mxu0
    %858 = vdwg.mxu0
    %s859 = scalar_lea.vmem %s6, 16
    %v860 = vld [vmem:[%s859] sm:$0xf]
    %v861 = vld [vmem:[%s859 + $0x4] sm:$0xf]
    %v864 = vunpack.c.l.b16 %v860
    %v865 = vunpack.c.l.b16 %v861
    %v866 = vpack.c.b16 %v865, %v864
    %v869 = vsel %vm676, %v660, 0
    %v872 = vsel %vm676, %v661, 0
    %v875 = vsel %vm676, %v662, 0
    %v878 = vsel %vm676, %v663, 0
    %v881 = vsel %vm676, %v664, 0
    %883 = vmatprep.subr.bf16.mxu0 0
    %884 = vmatpush1.bf16.msra.mxu0 %v866
    %885 = vmatprep.subr.bf16.mxu0 0
    %886 = vmatpush1.bf16.msra.mxu0 0
    %887 = vmatprep.subr.bf16.mxu0 0
    %888 = vmatpush1.bf16.msra.mxu0 0
    %889 = vmatprep.subr.bf16.mxu0 0
    %890 = vmatpush1.bf16.msra.mxu0 0
    %891 = vmatprep.subr.bf16.mxu0 0
    %892 = vmatpush1.bf16.msra.mxu0 0
    %893 = vmatprep.subr.bf16.mxu0 0
    %894 = vmatpush1.bf16.msra.mxu0 0
    %895 = vmatprep.subr.bf16.mxu0 0
    %896 = vmatpush1.bf16.msra.mxu0 0
    %897 = vmatprep.subr.bf16.mxu0 0
    %898 = vmatpush1.bf16.msra.mxu0 0
    %899 = vmatprep.subr.bf16.mxu0 0
    %900 = vmatpush1.bf16.msra.mxu0 0
    %901 = vmatprep.subr.bf16.mxu0 0
    %902 = vmatpush1.bf16.msra.mxu0 0
    %903 = vmatprep.subr.bf16.mxu0 0
    %904 = vmatpush1.bf16.msra.mxu0 0
    %905 = vmatprep.subr.bf16.mxu0 0
    %906 = vmatpush1.bf16.msra.mxu0 0
    %907 = vmatprep.subr.bf16.mxu0 0
    %908 = vmatpush1.bf16.msra.mxu0 0
    %909 = vmatprep.subr.bf16.mxu0 0
    %910 = vmatpush1.bf16.msra.mxu0 0
    %911 = vmatprep.subr.bf16.mxu0 0
    %912 = vmatpush1.bf16.msra.mxu0 0
    %913 = vmatprep.subr.bf16.mxu0 0
    %914 = vmatpush1.bf16.msra.mxu0 0
    %915 = vmatprep.mubr.bf16.mxu0 0
    %916 = vmatmul.mubr.bf16.gmra.mrb[0].mxu0 %v869
    %v917 = vpop.f32.mrb[0].mxu0
    %v918 = vadd.f32 0.0, %v917
    %v919 = vpop.f32.mrb[0].mxu0
    %v920 = vpop.f32.mrb[0].mxu0
    %v921 = vadd.f32 0.0, %v920
    %v922 = vpop.f32.mrb[0].mxu0
    %923 = vmatprep.mubr.bf16.mxu0 0
    %924 = vmatmul.mubr.bf16.gmra.mrb[0].mxu0 %v872
    %v925 = vpop.f32.mrb[0].mxu0
    %v926 = vadd.f32 0.0, %v925
    %v927 = vpop.f32.mrb[0].mxu0
    %v928 = vpop.f32.mrb[0].mxu0
    %v929 = vadd.f32 0.0, %v928
    %v930 = vpop.f32.mrb[0].mxu0
    %931 = vmatprep.mubr.bf16.mxu0 0
    %932 = vmatmul.mubr.bf16.gmra.mrb[0].mxu0 %v875
    %v933 = vpop.f32.mrb[0].mxu0
    %v934 = vadd.f32 0.0, %v933
    %v935 = vpop.f32.mrb[0].mxu0
    %v936 = vpop.f32.mrb[0].mxu0
    %v937 = vadd.f32 0.0, %v936
    %v938 = vpop.f32.mrb[0].mxu0
    %939 = vmatprep.mubr.bf16.mxu0 0
    %940 = vmatmul.mubr.bf16.gmra.mrb[0].mxu0 %v878
    %v941 = vpop.f32.mrb[0].mxu0
    %v942 = vadd.f32 0.0, %v941
    %v943 = vpop.f32.mrb[0].mxu0
    %v944 = vpop.f32.mrb[0].mxu0
    %v945 = vadd.f32 0.0, %v944
    %v946 = vpop.f32.mrb[0].mxu0
    %947 = vmatprep.mubr.bf16.mxu0 0
    %948 = vmatmul.mubr.bf16.gmra.mrb[0].mxu0 %v881
    %v949 = vpop.f32.mrb[0].mxu0
    %v950 = vadd.f32 0.0, %v949
    %v951 = vpop.f32.mrb[0].mxu0
    %v952 = vpop.f32.mrb[0].mxu0
    %v953 = vadd.f32 0.0, %v952
    %v954 = vpop.f32.mrb[0].mxu0
    %955 = vdwg.mxu0
    %v956 = vadd.f32 %v821, %v918
    %v957 = vadd.f32 %v824, %v921
    %v958 = vadd.f32 %v829, %v926
    %v959 = vadd.f32 %v832, %v929
    %v960 = vadd.f32 %v837, %v934
    %v961 = vadd.f32 %v840, %v937
    %v962 = vadd.f32 %v845, %v942
    %v963 = vadd.f32 %v848, %v945
    %v964 = vadd.f32 %v853, %v950
    %v965 = vadd.f32 %v856, %v953
    %v966 = vld [vmem:[%s7] sm:$0x1]
    %v968 = vlaneseq
    %v969 = vshrl.u32 %v968, 7
    %v970 = vsub.s32 0, %v969
    %v971 = vrot.slane %v966, %v970
    %v973 = vadd.f32 %v956, %v971
    %v974 = vadd.f32 %v957, %v971
    %v975 = vadd.f32 %v958, %v971
    %v976 = vadd.f32 %v959, %v971
    %v977 = vadd.f32 %v960, %v971
    %v978 = vadd.f32 %v961, %v971
    %v979 = vadd.f32 %v962, %v971
    %v980 = vadd.f32 %v963, %v971
    %v981 = vadd.f32 %v964, %v971
    %v982 = vadd.f32 %v965, %v971
    %v983 = vmax.f32 %v973, 0.0
    %v984 = vmax.f32 %v974, 0.0
    %v985 = vmax.f32 %v975, 0.0
    %v986 = vmax.f32 %v976, 0.0
    %v987 = vmax.f32 %v977, 0.0
    %v988 = vmax.f32 %v978, 0.0
    %v989 = vmax.f32 %v979, 0.0
    %v990 = vmax.f32 %v980, 0.0
    %v991 = vmax.f32 %v981, 0.0
    %v992 = vmax.f32 %v982, 0.0
    %994 = vset.pattern.permute.xlu0 0
    %995 = vperm.xlu0 %994, %v570
    %v996 = vpop.permute.xlu0 %995
    %999 = vset.pattern.permute.xlu0 0
    %1000 = vperm.xlu0 %999, %v571
    %v1001 = vpop.permute.xlu0 %1000
    %1004 = vset.pattern.permute.xlu0 0
    %1005 = vperm.xlu0 %1004, %v572
    %v1006 = vpop.permute.xlu0 %1005
    %1009 = vset.pattern.permute.xlu0 0
    %1010 = vperm.xlu0 %1009, %v573
    %v1011 = vpop.permute.xlu0 %1010
    %1014 = vset.pattern.permute.xlu0 0
    %1015 = vperm.xlu0 %1014, %v574
    %v1016 = vpop.permute.xlu0 %1015
    %1019 = vset.pattern.permute.xlu0 0
    %1020 = vperm.xlu0 %1019, %v575
    %v1021 = vpop.permute.xlu0 %1020
    %1024 = vset.pattern.permute.xlu0 0
    %1025 = vperm.xlu0 %1024, %v576
    %v1026 = vpop.permute.xlu0 %1025
    %1029 = vset.pattern.permute.xlu0 0
    %1030 = vperm.xlu0 %1029, %v577
    %v1031 = vpop.permute.xlu0 %1030
    %1034 = vset.pattern.permute.xlu0 0
    %1035 = vperm.xlu0 %1034, %v578
    %v1036 = vpop.permute.xlu0 %1035
    %1039 = vset.pattern.permute.xlu0 0
    %1040 = vperm.xlu0 %1039, %v579
    %v1041 = vpop.permute.xlu0 %1040
    %v1043 = vmul.f32 %v983, %v996
    %v1044 = vmul.f32 %v984, %v1001
    %v1045 = vmul.f32 %v985, %v1006
    %v1046 = vmul.f32 %v986, %v1011
    %v1047 = vmul.f32 %v987, %v1016
    %v1048 = vmul.f32 %v988, %v1021
    %v1049 = vmul.f32 %v989, %v1026
    %v1050 = vmul.f32 %v990, %v1031
    %v1051 = vmul.f32 %v991, %v1036
    %v1052 = vmul.f32 %v992, %v1041
    %v1063 = vcombine.high %v1043, %v1043
    %v1065 = vunpack.c.l.s4 1983009808
    %v1066 = vunpack.c.0.s8 %v1065
    %v1067 = vlaneseq
    %v1068 = vshrl.u32 %v1067, 7
    %v1069 = vsub.s32 %v1066, %v1068
    %v1070 = vrot.slane %v1043, %v1069
    %v1072 = vunpack.c.l.s4 1983009808
    %v1073 = vunpack.c.0.s8 %v1072
    %v1074 = vlaneseq
    %v1075 = vshrl.u32 %v1074, 7
    %v1076 = vsub.s32 %v1073, %v1075
    %v1077 = vrot.slane %v1063, %v1076
    %v1078 = vcombine.high %v1070, %v1070
    %v1079 = vcombine.high %v1077, %v1077
    %v1080 = vcombine.high %v1044, %v1044
    %v1082 = vunpack.c.l.s4 1983009808
    %v1083 = vunpack.c.0.s8 %v1082
    %v1084 = vlaneseq
    %v1085 = vshrl.u32 %v1084, 7
    %v1086 = vsub.s32 %v1083, %v1085
    %v1087 = vrot.slane %v1044, %v1086
    %v1089 = vunpack.c.l.s4 1983009808
    %v1090 = vunpack.c.0.s8 %v1089
    %v1091 = vlaneseq
    %v1092 = vshrl.u32 %v1091, 7
    %v1093 = vsub.s32 %v1090, %v1092
    %v1094 = vrot.slane %v1080, %v1093
    %v1095 = vcombine.high %v1087, %v1087
    %v1096 = vcombine.high %v1094, %v1094
    %v1097 = vcombine.high %v1045, %v1045
    %v1099 = vunpack.c.l.s4 1983009808
    %v1100 = vunpack.c.0.s8 %v1099
    %v1101 = vlaneseq
    %v1102 = vshrl.u32 %v1101, 7
    %v1103 = vsub.s32 %v1100, %v1102
    %v1104 = vrot.slane %v1045, %v1103
    %v1106 = vunpack.c.l.s4 1983009808
    %v1107 = vunpack.c.0.s8 %v1106
    %v1108 = vlaneseq
    %v1109 = vshrl.u32 %v1108, 7
    %v1110 = vsub.s32 %v1107, %v1109
    %v1111 = vrot.slane %v1097, %v1110
    %v1112 = vcombine.high %v1104, %v1104
    %v1113 = vcombine.high %v1111, %v1111
    %v1114 = vcombine.high %v1046, %v1046
    %v1116 = vunpack.c.l.s4 1983009808
    %v1117 = vunpack.c.0.s8 %v1116
    %v1118 = vlaneseq
    %v1119 = vshrl.u32 %v1118, 7
    %v1120 = vsub.s32 %v1117, %v1119
    %v1121 = vrot.slane %v1046, %v1120
    %v1123 = vunpack.c.l.s4 1983009808
    %v1124 = vunpack.c.0.s8 %v1123
    %v1125 = vlaneseq
    %v1126 = vshrl.u32 %v1125, 7
    %v1127 = vsub.s32 %v1124, %v1126
    %v1128 = vrot.slane %v1114, %v1127
    %v1129 = vcombine.high %v1121, %v1121
    %v1130 = vcombine.high %v1128, %v1128
    %v1131 = vcombine.high %v1047, %v1047
    %v1133 = vunpack.c.l.s4 1983009808
    %v1134 = vunpack.c.0.s8 %v1133
    %v1135 = vlaneseq
    %v1136 = vshrl.u32 %v1135, 7
    %v1137 = vsub.s32 %v1134, %v1136
    %v1138 = vrot.slane %v1047, %v1137
    %v1140 = vunpack.c.l.s4 1983009808
    %v1141 = vunpack.c.0.s8 %v1140
    %v1142 = vlaneseq
    %v1143 = vshrl.u32 %v1142, 7
    %v1144 = vsub.s32 %v1141, %v1143
    %v1145 = vrot.slane %v1131, %v1144
    %v1146 = vcombine.high %v1138, %v1138
    %v1147 = vcombine.high %v1145, %v1145
    %v1148 = vcombine.high %v1048, %v1048
    %v1150 = vunpack.c.l.s4 1983009808
    %v1151 = vunpack.c.0.s8 %v1150
    %v1152 = vlaneseq
    %v1153 = vshrl.u32 %v1152, 7
    %v1154 = vsub.s32 %v1151, %v1153
    %v1155 = vrot.slane %v1048, %v1154
    %v1157 = vunpack.c.l.s4 1983009808
    %v1158 = vunpack.c.0.s8 %v1157
    %v1159 = vlaneseq
    %v1160 = vshrl.u32 %v1159, 7
    %v1161 = vsub.s32 %v1158, %v1160
    %v1162 = vrot.slane %v1148, %v1161
    %v1163 = vcombine.high %v1155, %v1155
    %v1164 = vcombine.high %v1162, %v1162
    %v1165 = vcombine.high %v1049, %v1049
    %v1167 = vunpack.c.l.s4 1983009808
    %v1168 = vunpack.c.0.s8 %v1167
    %v1169 = vlaneseq
    %v1170 = vshrl.u32 %v1169, 7
    %v1171 = vsub.s32 %v1168, %v1170
    %v1172 = vrot.slane %v1049, %v1171
    %v1174 = vunpack.c.l.s4 1983009808
    %v1175 = vunpack.c.0.s8 %v1174
    %v1176 = vlaneseq
    %v1177 = vshrl.u32 %v1176, 7
    %v1178 = vsub.s32 %v1175, %v1177
    %v1179 = vrot.slane %v1165, %v1178
    %v1180 = vcombine.high %v1172, %v1172
    %v1181 = vcombine.high %v1179, %v1179
    %v1182 = vcombine.high %v1050, %v1050
    %v1184 = vunpack.c.l.s4 1983009808
    %v1185 = vunpack.c.0.s8 %v1184
    %v1186 = vlaneseq
    %v1187 = vshrl.u32 %v1186, 7
    %v1188 = vsub.s32 %v1185, %v1187
    %v1189 = vrot.slane %v1050, %v1188
    %v1191 = vunpack.c.l.s4 1983009808
    %v1192 = vunpack.c.0.s8 %v1191
    %v1193 = vlaneseq
    %v1194 = vshrl.u32 %v1193, 7
    %v1195 = vsub.s32 %v1192, %v1194
    %v1196 = vrot.slane %v1182, %v1195
    %v1197 = vcombine.high %v1189, %v1189
    %v1198 = vcombine.high %v1196, %v1196
    %v1199 = vcombine.high %v1051, %v1051
    %v1201 = vunpack.c.l.s4 1983009808
    %v1202 = vunpack.c.0.s8 %v1201
    %v1203 = vlaneseq
    %v1204 = vshrl.u32 %v1203, 7
    %v1205 = vsub.s32 %v1202, %v1204
    %v1206 = vrot.slane %v1051, %v1205
    %v1208 = vunpack.c.l.s4 1983009808
    %v1209 = vunpack.c.0.s8 %v1208
    %v1210 = vlaneseq
    %v1211 = vshrl.u32 %v1210, 7
    %v1212 = vsub.s32 %v1209, %v1211
    %v1213 = vrot.slane %v1199, %v1212
    %v1214 = vcombine.high %v1206, %v1206
    %v1215 = vcombine.high %v1213, %v1213
    %v1216 = vcombine.high %v1052, %v1052
    %v1218 = vunpack.c.l.s4 1983009808
    %v1219 = vunpack.c.0.s8 %v1218
    %v1220 = vlaneseq
    %v1221 = vshrl.u32 %v1220, 7
    %v1222 = vsub.s32 %v1219, %v1221
    %v1223 = vrot.slane %v1052, %v1222
    %v1225 = vunpack.c.l.s4 1983009808
    %v1226 = vunpack.c.0.s8 %v1225
    %v1227 = vlaneseq
    %v1228 = vshrl.u32 %v1227, 7
    %v1229 = vsub.s32 %v1226, %v1228
    %v1230 = vrot.slane %v1216, %v1229
    %v1231 = vcombine.high %v1223, %v1223
    %v1232 = vcombine.high %v1230, %v1230
    %v1273 = vrot.slane %v1070, 7
    %v1274 = vrot.slane %v1273, 2
    %v1275 = vrot.slane %v1078, 7
    %v1276 = vrot.slane %v1275, 2
    %v1277 = vrot.slane %v1077, 7
    %v1278 = vrot.slane %v1277, 2
    %v1279 = vrot.slane %v1079, 7
    %v1280 = vrot.slane %v1279, 2
    %v1281 = vrot.slane %v1087, 7
    %v1282 = vrot.slane %v1281, 2
    %v1283 = vrot.slane %v1095, 7
    %v1284 = vrot.slane %v1283, 2
    %v1285 = vrot.slane %v1094, 7
    %v1286 = vrot.slane %v1285, 2
    %v1287 = vrot.slane %v1096, 7
    %v1288 = vrot.slane %v1287, 2
    %v1289 = vrot.slane %v1104, 7
    %v1290 = vrot.slane %v1289, 2
    %v1291 = vrot.slane %v1112, 7
    %v1292 = vrot.slane %v1291, 2
    %v1293 = vrot.slane %v1111, 7
    %v1294 = vrot.slane %v1293, 2
    %v1295 = vrot.slane %v1113, 7
    %v1296 = vrot.slane %v1295, 2
    %v1297 = vrot.slane %v1121, 7
    %v1298 = vrot.slane %v1297, 2
    %v1299 = vrot.slane %v1129, 7
    %v1300 = vrot.slane %v1299, 2
    %v1301 = vrot.slane %v1128, 7
    %v1302 = vrot.slane %v1301, 2
    %v1303 = vrot.slane %v1130, 7
    %v1304 = vrot.slane %v1303, 2
    %v1305 = vrot.slane %v1138, 7
    %v1306 = vrot.slane %v1305, 2
    %v1307 = vrot.slane %v1146, 7
    %v1308 = vrot.slane %v1307, 2
    %v1309 = vrot.slane %v1145, 7
    %v1310 = vrot.slane %v1309, 2
    %v1311 = vrot.slane %v1147, 7
    %v1312 = vrot.slane %v1311, 2
    %v1313 = vrot.slane %v1155, 7
    %v1314 = vrot.slane %v1313, 2
    %v1315 = vrot.slane %v1163, 7
    %v1316 = vrot.slane %v1315, 2
    %v1317 = vrot.slane %v1162, 7
    %v1318 = vrot.slane %v1317, 2
    %v1319 = vrot.slane %v1164, 7
    %v1320 = vrot.slane %v1319, 2
    %v1321 = vrot.slane %v1172, 7
    %v1322 = vrot.slane %v1321, 2
    %v1323 = vrot.slane %v1180, 7
    %v1324 = vrot.slane %v1323, 2
    %v1325 = vrot.slane %v1179, 7
    %v1326 = vrot.slane %v1325, 2
    %v1327 = vrot.slane %v1181, 7
    %v1328 = vrot.slane %v1327, 2
    %v1329 = vrot.slane %v1189, 7
    %v1330 = vrot.slane %v1329, 2
    %v1331 = vrot.slane %v1197, 7
    %v1332 = vrot.slane %v1331, 2
    %v1333 = vrot.slane %v1196, 7
    %v1334 = vrot.slane %v1333, 2
    %v1335 = vrot.slane %v1198, 7
    %v1336 = vrot.slane %v1335, 2
    %v1337 = vrot.slane %v1206, 7
    %v1338 = vrot.slane %v1337, 2
    %v1339 = vrot.slane %v1214, 7
    %v1340 = vrot.slane %v1339, 2
    %v1341 = vrot.slane %v1213, 7
    %v1342 = vrot.slane %v1341, 2
    %v1343 = vrot.slane %v1215, 7
    %v1344 = vrot.slane %v1343, 2
    %v1345 = vrot.slane %v1223, 7
    %v1346 = vrot.slane %v1345, 2
    %v1347 = vrot.slane %v1231, 7
    %v1348 = vrot.slane %v1347, 2
    %v1349 = vrot.slane %v1230, 7
    %v1350 = vrot.slane %v1349, 2
    %v1351 = vrot.slane %v1232, 7
    %v1352 = vrot.slane %v1351, 2
    %v1393 = vmax.f32 %v1070, %v1274
    %v1394 = vmax.f32 %v1078, %v1276
    %v1395 = vmax.f32 %v1077, %v1278
    %v1396 = vmax.f32 %v1079, %v1280
    %v1397 = vmax.f32 %v1087, %v1282
    %v1398 = vmax.f32 %v1095, %v1284
    %v1399 = vmax.f32 %v1094, %v1286
    %v1400 = vmax.f32 %v1096, %v1288
    %v1401 = vmax.f32 %v1104, %v1290
    %v1402 = vmax.f32 %v1112, %v1292
    %v1403 = vmax.f32 %v1111, %v1294
    %v1404 = vmax.f32 %v1113, %v1296
    %v1405 = vmax.f32 %v1121, %v1298
    %v1406 = vmax.f32 %v1129, %v1300
    %v1407 = vmax.f32 %v1128, %v1302
    %v1408 = vmax.f32 %v1130, %v1304
    %v1409 = vmax.f32 %v1138, %v1306
    %v1410 = vmax.f32 %v1146, %v1308
    %v1411 = vmax.f32 %v1145, %v1310
    %v1412 = vmax.f32 %v1147, %v1312
    %v1413 = vmax.f32 %v1155, %v1314
    %v1414 = vmax.f32 %v1163, %v1316
    %v1415 = vmax.f32 %v1162, %v1318
    %v1416 = vmax.f32 %v1164, %v1320
    %v1417 = vmax.f32 %v1172, %v1322
    %v1418 = vmax.f32 %v1180, %v1324
    %v1419 = vmax.f32 %v1179, %v1326
    %v1420 = vmax.f32 %v1181, %v1328
    %v1421 = vmax.f32 %v1189, %v1330
    %v1422 = vmax.f32 %v1197, %v1332
    %v1423 = vmax.f32 %v1196, %v1334
    %v1424 = vmax.f32 %v1198, %v1336
    %v1425 = vmax.f32 %v1206, %v1338
    %v1426 = vmax.f32 %v1214, %v1340
    %v1427 = vmax.f32 %v1213, %v1342
    %v1428 = vmax.f32 %v1215, %v1344
    %v1429 = vmax.f32 %v1223, %v1346
    %v1430 = vmax.f32 %v1231, %v1348
    %v1431 = vmax.f32 %v1230, %v1350
    %v1432 = vmax.f32 %v1232, %v1352
    %v1473 = vlaneseq
    %v1474 = vshrl.u32 %v1473, 7
    %v1475 = vsub.s32 0, %v1474
    %v1476 = vrot.slane %v1393, %v1475
    %v1477 = vlaneseq
    %v1478 = vshrl.u32 %v1477, 7
    %v1479 = vsub.s32 0, %v1478
    %v1480 = vrot.slane %v1394, %v1479
    %v1481 = vlaneseq
    %v1482 = vshrl.u32 %v1481, 7
    %v1483 = vsub.s32 0, %v1482
    %v1484 = vrot.slane %v1395, %v1483
    %v1485 = vlaneseq
    %v1486 = vshrl.u32 %v1485, 7
    %v1487 = vsub.s32 0, %v1486
    %v1488 = vrot.slane %v1396, %v1487
    %v1489 = vlaneseq
    %v1490 = vshrl.u32 %v1489, 7
    %v1491 = vsub.s32 0, %v1490
    %v1492 = vrot.slane %v1397, %v1491
    %v1493 = vlaneseq
    %v1494 = vshrl.u32 %v1493, 7
    %v1495 = vsub.s32 0, %v1494
    %v1496 = vrot.slane %v1398, %v1495
    %v1497 = vlaneseq
    %v1498 = vshrl.u32 %v1497, 7
    %v1499 = vsub.s32 0, %v1498
    %v1500 = vrot.slane %v1399, %v1499
    %v1501 = vlaneseq
    %v1502 = vshrl.u32 %v1501, 7
    %v1503 = vsub.s32 0, %v1502
    %v1504 = vrot.slane %v1400, %v1503
    %v1505 = vlaneseq
    %v1506 = vshrl.u32 %v1505, 7
    %v1507 = vsub.s32 0, %v1506
    %v1508 = vrot.slane %v1401, %v1507
    %v1509 = vlaneseq
    %v1510 = vshrl.u32 %v1509, 7
    %v1511 = vsub.s32 0, %v1510
    %v1512 = vrot.slane %v1402, %v1511
    %v1513 = vlaneseq
    %v1514 = vshrl.u32 %v1513, 7
    %v1515 = vsub.s32 0, %v1514
    %v1516 = vrot.slane %v1403, %v1515
    %v1517 = vlaneseq
    %v1518 = vshrl.u32 %v1517, 7
    %v1519 = vsub.s32 0, %v1518
    %v1520 = vrot.slane %v1404, %v1519
    %v1521 = vlaneseq
    %v1522 = vshrl.u32 %v1521, 7
    %v1523 = vsub.s32 0, %v1522
    %v1524 = vrot.slane %v1405, %v1523
    %v1525 = vlaneseq
    %v1526 = vshrl.u32 %v1525, 7
    %v1527 = vsub.s32 0, %v1526
    %v1528 = vrot.slane %v1406, %v1527
    %v1529 = vlaneseq
    %v1530 = vshrl.u32 %v1529, 7
    %v1531 = vsub.s32 0, %v1530
    %v1532 = vrot.slane %v1407, %v1531
    %v1533 = vlaneseq
    %v1534 = vshrl.u32 %v1533, 7
    %v1535 = vsub.s32 0, %v1534
    %v1536 = vrot.slane %v1408, %v1535
    %v1537 = vlaneseq
    %v1538 = vshrl.u32 %v1537, 7
    %v1539 = vsub.s32 0, %v1538
    %v1540 = vrot.slane %v1409, %v1539
    %v1541 = vlaneseq
    %v1542 = vshrl.u32 %v1541, 7
    %v1543 = vsub.s32 0, %v1542
    %v1544 = vrot.slane %v1410, %v1543
    %v1545 = vlaneseq
    %v1546 = vshrl.u32 %v1545, 7
    %v1547 = vsub.s32 0, %v1546
    %v1548 = vrot.slane %v1411, %v1547
    %v1549 = vlaneseq
    %v1550 = vshrl.u32 %v1549, 7
    %v1551 = vsub.s32 0, %v1550
    %v1552 = vrot.slane %v1412, %v1551
    %v1553 = vlaneseq
    %v1554 = vshrl.u32 %v1553, 7
    %v1555 = vsub.s32 0, %v1554
    %v1556 = vrot.slane %v1413, %v1555
    %v1557 = vlaneseq
    %v1558 = vshrl.u32 %v1557, 7
    %v1559 = vsub.s32 0, %v1558
    %v1560 = vrot.slane %v1414, %v1559
    %v1561 = vlaneseq
    %v1562 = vshrl.u32 %v1561, 7
    %v1563 = vsub.s32 0, %v1562
    %v1564 = vrot.slane %v1415, %v1563
    %v1565 = vlaneseq
    %v1566 = vshrl.u32 %v1565, 7
    %v1567 = vsub.s32 0, %v1566
    %v1568 = vrot.slane %v1416, %v1567
    %v1569 = vlaneseq
    %v1570 = vshrl.u32 %v1569, 7
    %v1571 = vsub.s32 0, %v1570
    %v1572 = vrot.slane %v1417, %v1571
    %v1573 = vlaneseq
    %v1574 = vshrl.u32 %v1573, 7
    %v1575 = vsub.s32 0, %v1574
    %v1576 = vrot.slane %v1418, %v1575
    %v1577 = vlaneseq
    %v1578 = vshrl.u32 %v1577, 7
    %v1579 = vsub.s32 0, %v1578
    %v1580 = vrot.slane %v1419, %v1579
    %v1581 = vlaneseq
    %v1582 = vshrl.u32 %v1581, 7
    %v1583 = vsub.s32 0, %v1582
    %v1584 = vrot.slane %v1420, %v1583
    %v1585 = vlaneseq
    %v1586 = vshrl.u32 %v1585, 7
    %v1587 = vsub.s32 0, %v1586
    %v1588 = vrot.slane %v1421, %v1587
    %v1589 = vlaneseq
    %v1590 = vshrl.u32 %v1589, 7
    %v1591 = vsub.s32 0, %v1590
    %v1592 = vrot.slane %v1422, %v1591
    %v1593 = vlaneseq
    %v1594 = vshrl.u32 %v1593, 7
    %v1595 = vsub.s32 0, %v1594
    %v1596 = vrot.slane %v1423, %v1595
    %v1597 = vlaneseq
    %v1598 = vshrl.u32 %v1597, 7
    %v1599 = vsub.s32 0, %v1598
    %v1600 = vrot.slane %v1424, %v1599
    %v1601 = vlaneseq
    %v1602 = vshrl.u32 %v1601, 7
    %v1603 = vsub.s32 0, %v1602
    %v1604 = vrot.slane %v1425, %v1603
    %v1605 = vlaneseq
    %v1606 = vshrl.u32 %v1605, 7
    %v1607 = vsub.s32 0, %v1606
    %v1608 = vrot.slane %v1426, %v1607
    %v1609 = vlaneseq
    %v1610 = vshrl.u32 %v1609, 7
    %v1611 = vsub.s32 0, %v1610
    %v1612 = vrot.slane %v1427, %v1611
    %v1613 = vlaneseq
    %v1614 = vshrl.u32 %v1613, 7
    %v1615 = vsub.s32 0, %v1614
    %v1616 = vrot.slane %v1428, %v1615
    %v1617 = vlaneseq
    %v1618 = vshrl.u32 %v1617, 7
    %v1619 = vsub.s32 0, %v1618
    %v1620 = vrot.slane %v1429, %v1619
    %v1621 = vlaneseq
    %v1622 = vshrl.u32 %v1621, 7
    %v1623 = vsub.s32 0, %v1622
    %v1624 = vrot.slane %v1430, %v1623
    %v1625 = vlaneseq
    %v1626 = vshrl.u32 %v1625, 7
    %v1627 = vsub.s32 0, %v1626
    %v1628 = vrot.slane %v1431, %v1627
    %v1629 = vlaneseq
    %v1630 = vshrl.u32 %v1629, 7
    %v1631 = vsub.s32 0, %v1630
    %v1632 = vrot.slane %v1432, %v1631
    %vm1633 = vcmask 1041409
    %v1634 = vsel %vm1633, %v1480, %v1476
    %vm1635 = vcmask 1042434
    %v1636 = vsel %vm1635, %v1484, %v1634
    %vm1637 = vcmask 1043459
    %v1638 = vsel %vm1637, %v1488, %v1636
    %vm1639 = vcmask 1044484
    %v1640 = vsel %vm1639, %v1492, %v1638
    %vm1641 = vcmask 1045509
    %v1642 = vsel %vm1641, %v1496, %v1640
    %vm1643 = vcmask 1046534
    %v1644 = vsel %vm1643, %v1500, %v1642
    %vm1645 = vcmask 1047559
    %v1646 = vsel %vm1645, %v1504, %v1644
    %v1647 = vsel %vm1633, %v1512, %v1508
    %v1648 = vsel %vm1635, %v1516, %v1647
    %v1649 = vsel %vm1637, %v1520, %v1648
    %v1650 = vsel %vm1639, %v1524, %v1649
    %v1651 = vsel %vm1641, %v1528, %v1650
    %v1652 = vsel %vm1643, %v1532, %v1651
    %v1653 = vsel %vm1645, %v1536, %v1652
    %v1654 = vsel %vm1633, %v1544, %v1540
    %v1655 = vsel %vm1635, %v1548, %v1654
    %v1656 = vsel %vm1637, %v1552, %v1655
    %v1657 = vsel %vm1633, %v1560, %v1556
    %v1658 = vsel %vm1635, %v1564, %v1657
    %v1659 = vsel %vm1637, %v1568, %v1658
    %v1660 = vsel %vm1639, %v1572, %v1659
    %v1661 = vsel %vm1641, %v1576, %v1660
    %v1662 = vsel %vm1643, %v1580, %v1661
    %v1663 = vsel %vm1645, %v1584, %v1662
    %v1664 = vsel %vm1633, %v1592, %v1588
    %v1665 = vsel %vm1635, %v1596, %v1664
    %v1666 = vsel %vm1637, %v1600, %v1665
    %v1667 = vsel %vm1639, %v1604, %v1666
    %v1668 = vsel %vm1641, %v1608, %v1667
    %v1669 = vsel %vm1643, %v1612, %v1668
    %v1670 = vsel %vm1645, %v1616, %v1669
    %v1671 = vsel %vm1633, %v1624, %v1620
    %v1672 = vsel %vm1635, %v1628, %v1671
    %v1673 = vsel %vm1637, %v1632, %v1672
    %v1680 = vsel %vm210, %v1656, 0.0
    %v1681 = vsel %vm210, %v1673, 0.0
    %v1682 = vld [vmem:[%s3] sm:$0xff]
    %v1683 = vld [vmem:[%s3 + $0x8] sm:$0xff]
    %v1684 = vld [vmem:[%s3 + $0x10] sm:$0xff]
    %v1685 = vld [vmem:[%s3 + $0x18] sm:$0xff]
    %v1686 = vld [vmem:[%s3 + $0x20] sm:$0xff]
    %v1687 = vld [vmem:[%s3 + $0x28] sm:$0xff]
    %v1688 = vpack.c.bf16 %v1653, %v1646
    %v1689 = vpack.c.bf16 %v1663, %v1680
    %v1690 = vpack.c.bf16 %v1681, %v1670
    %v1693 = vrot.slane %v1646, 1
    %v1694 = vrot.slane %v1653, 1
    %v1695 = vsel %vm118, %v1693, %v1694
    %v1696 = vrot.slane %v1680, 1
    %v1697 = vsel %vm118, %v1694, %v1696
    %v1698 = vrot.slane %v1663, 1
    %v1699 = vsel %vm118, %v1696, %v1698
    %v1700 = vrot.slane %v1670, 1
    %v1701 = vsel %vm118, %v1698, %v1700
    %v1702 = vrot.slane %v1681, 1
    %v1703 = vsel %vm118, %v1700, %v1702
    %v1710 = vsel %vm118, %v1702, 0.0
    %v1711 = vpack.c.bf16 %v1697, %v1695
    %v1712 = vpack.c.bf16 %v1701, %v1699
    %v1713 = vpack.c.bf16 %v1710, %v1703
    %v1714 = vrot.slane %v1646, 2
    %v1715 = vrot.slane %v1653, 2
    %v1716 = vsel %vm154, %v1714, %v1715
    %v1717 = vrot.slane %v1680, 2
    %v1718 = vsel %vm154, %v1715, %v1717
    %v1719 = vrot.slane %v1663, 2
    %v1720 = vsel %vm154, %v1717, %v1719
    %v1721 = vrot.slane %v1670, 2
    %v1722 = vsel %vm154, %v1719, %v1721
    %v1723 = vrot.slane %v1681, 2
    %v1724 = vsel %vm154, %v1721, %v1723
    %v1731 = vsel %vm154, %v1723, 0.0
    %v1732 = vpack.c.bf16 %v1718, %v1716
    %v1733 = vpack.c.bf16 %v1722, %v1720
    %v1734 = vpack.c.bf16 %v1731, %v1724
    %v1735 = vld [vmem:[%s8] sm:$0xf]
    %v1736 = vld [vmem:[%s8 + $0x4] sm:$0xf]
    %v1737 = vld [vmem:[%s8 + $0x8] sm:$0xf]
    %v1738 = vld [vmem:[%s8 + $0xc] sm:$0xf]
    %s1739 = scalar_lea.vmem %s8, 16
    %v1740 = vld [vmem:[%s1739] sm:$0xf]
    %v1741 = vld [vmem:[%s1739 + $0x4] sm:$0xf]
    %v1742 = vld [vmem:[%s1739 + $0x8] sm:$0xf]
    %v1743 = vld [vmem:[%s1739 + $0xc] sm:$0xf]
    %v1748 = vunpack.c.l.b16 %v1740
    %v1749 = vunpack.c.l.b16 %v1741
    %v1750 = vunpack.c.l.b16 %v1742
    %v1751 = vunpack.c.l.b16 %v1743
    %v1752 = vpack.c.b16 %v1749, %v1748
    %v1753 = vpack.c.b16 %v1751, %v1750
    %vm1756 = vcmask 261120
    %v1758 = vsel %vm1756, %v1711, 0
    %v1761 = vsel %vm1756, %v1712, 0
    %v1764 = vsel %vm1756, %v1713, 0
    %1766 = vmatprep.subr.bf16.mxu0 0
    %1767 = vmatpush1.bf16.msra.mxu0 %v1752
    %1768 = vmatprep.subr.bf16.mxu0 0
    %1769 = vmatpush1.bf16.msra.mxu0 %v1753
    %1770 = vmatprep.subr.bf16.mxu0 0
    %1771 = vmatpush1.bf16.msra.mxu0 0
    %1772 = vmatprep.subr.bf16.mxu0 0
    %1773 = vmatpush1.bf16.msra.mxu0 0
    %1774 = vmatprep.subr.bf16.mxu0 0
    %1775 = vmatpush1.bf16.msra.mxu0 0
    %1776 = vmatprep.subr.bf16.mxu0 0
    %1777 = vmatpush1.bf16.msra.mxu0 0
    %1778 = vmatprep.subr.bf16.mxu0 0
    %1779 = vmatpush1.bf16.msra.mxu0 0
    %1780 = vmatprep.subr.bf16.mxu0 0
    %1781 = vmatpush1.bf16.msra.mxu0 0
    %1782 = vmatprep.subr.bf16.mxu0 0
    %1783 = vmatpush1.bf16.msra.mxu0 0
    %1784 = vmatprep.subr.bf16.mxu0 0
    %1785 = vmatpush1.bf16.msra.mxu0 0
    %1786 = vmatprep.subr.bf16.mxu0 0
    %1787 = vmatpush1.bf16.msra.mxu0 0
    %1788 = vmatprep.subr.bf16.mxu0 0
    %1789 = vmatpush1.bf16.msra.mxu0 0
    %1790 = vmatprep.subr.bf16.mxu0 0
    %1791 = vmatpush1.bf16.msra.mxu0 0
    %1792 = vmatprep.subr.bf16.mxu0 0
    %1793 = vmatpush1.bf16.msra.mxu0 0
    %1794 = vmatprep.subr.bf16.mxu0 0
    %1795 = vmatpush1.bf16.msra.mxu0 0
    %1796 = vmatprep.subr.bf16.mxu0 0
    %1797 = vmatpush1.bf16.msra.mxu0 0
    %1798 = vmatprep.mubr.bf16.mxu0 0
    %1799 = vmatmul.mubr.bf16.gmra.mrb[0].mxu0 %v1758
    %v1800 = vpop.f32.mrb[0].mxu0
    %v1801 = vadd.f32 0.0, %v1800
    %v1802 = vpop.f32.mrb[0].mxu0
    %v1803 = vpop.f32.mrb[0].mxu0
    %v1804 = vadd.f32 0.0, %v1803
    %v1805 = vpop.f32.mrb[0].mxu0
    %1806 = vmatprep.mubr.bf16.mxu0 0
    %1807 = vmatmul.mubr.bf16.gmra.mrb[0].mxu0 %v1761
    %v1808 = vpop.f32.mrb[0].mxu0
    %v1809 = vadd.f32 0.0, %v1808
    %v1810 = vpop.f32.mrb[0].mxu0
    %v1811 = vpop.f32.mrb[0].mxu0
    %v1812 = vadd.f32 0.0, %v1811
    %v1813 = vpop.f32.mrb[0].mxu0
    %1814 = vmatprep.mubr.bf16.mxu0 0
    %1815 = vmatmul.mubr.bf16.gmra.mrb[0].mxu0 %v1764
    %v1816 = vpop.f32.mrb[0].mxu0
    %v1817 = vadd.f32 0.0, %v1816
    %v1818 = vpop.f32.mrb[0].mxu0
    %v1819 = vpop.f32.mrb[0].mxu0
    %v1820 = vadd.f32 0.0, %v1819
    %v1821 = vpop.f32.mrb[0].mxu0
    %1822 = vdwg.mxu0
    %v1827 = vunpack.c.l.b16 %v1735
    %v1828 = vunpack.c.l.b16 %v1736
    %v1829 = vunpack.c.l.b16 %v1737
    %v1830 = vunpack.c.l.b16 %v1738
    %v1831 = vpack.c.b16 %v1828, %v1827
    %v1832 = vpack.c.b16 %v1830, %v1829
    %v1836 = vsel %vm1756, %v1688, 0
    %v1839 = vsel %vm1756, %v1689, 0
    %v1842 = vsel %vm1756, %v1690, 0
    %1844 = vmatprep.subr.bf16.mxu0 0
    %1845 = vmatpush1.bf16.msra.mxu0 %v1831
    %1846 = vmatprep.subr.bf16.mxu0 0
    %1847 = vmatpush1.bf16.msra.mxu0 %v1832
    %1848 = vmatprep.subr.bf16.mxu0 0
    %1849 = vmatpush1.bf16.msra.mxu0 0
    %1850 = vmatprep.subr.bf16.mxu0 0
    %1851 = vmatpush1.bf16.msra.mxu0 0
    %1852 = vmatprep.subr.bf16.mxu0 0
    %1853 = vmatpush1.bf16.msra.mxu0 0
    %1854 = vmatprep.subr.bf16.mxu0 0
    %1855 = vmatpush1.bf16.msra.mxu0 0
    %1856 = vmatprep.subr.bf16.mxu0 0
    %1857 = vmatpush1.bf16.msra.mxu0 0
    %1858 = vmatprep.subr.bf16.mxu0 0
    %1859 = vmatpush1.bf16.msra.mxu0 0
    %1860 = vmatprep.subr.bf16.mxu0 0
    %1861 = vmatpush1.bf16.msra.mxu0 0
    %1862 = vmatprep.subr.bf16.mxu0 0
    %1863 = vmatpush1.bf16.msra.mxu0 0
    %1864 = vmatprep.subr.bf16.mxu0 0
    %1865 = vmatpush1.bf16.msra.mxu0 0
    %1866 = vmatprep.subr.bf16.mxu0 0
    %1867 = vmatpush1.bf16.msra.mxu0 0
    %1868 = vmatprep.subr.bf16.mxu0 0
    %1869 = vmatpush1.bf16.msra.mxu0 0
    %1870 = vmatprep.subr.bf16.mxu0 0
    %1871 = vmatpush1.bf16.msra.mxu0 0
    %1872 = vmatprep.subr.bf16.mxu0 0
    %1873 = vmatpush1.bf16.msra.mxu0 0
    %1874 = vmatprep.subr.bf16.mxu0 0
    %1875 = vmatpush1.bf16.msra.mxu0 0
    %1876 = vmatprep.mubr.bf16.mxu0 0
    %1877 = vmatmul.mubr.bf16.gmra.mrb[0].mxu0 %v1836
    %v1878 = vpop.f32.mrb[0].mxu0
    %v1879 = vadd.f32 %v1801, %v1878
    %v1880 = vpop.f32.mrb[0].mxu0
    %v1881 = vpop.f32.mrb[0].mxu0
    %v1882 = vadd.f32 %v1804, %v1881
    %v1883 = vpop.f32.mrb[0].mxu0
    %1884 = vmatprep.mubr.bf16.mxu0 0
    %1885 = vmatmul.mubr.bf16.gmra.mrb[0].mxu0 %v1839
    %v1886 = vpop.f32.mrb[0].mxu0
    %v1887 = vadd.f32 %v1809, %v1886
    %v1888 = vpop.f32.mrb[0].mxu0
    %v1889 = vpop.f32.mrb[0].mxu0
    %v1890 = vadd.f32 %v1812, %v1889
    %v1891 = vpop.f32.mrb[0].mxu0
    %1892 = vmatprep.mubr.bf16.mxu0 0
    %1893 = vmatmul.mubr.bf16.gmra.mrb[0].mxu0 %v1842
    %v1894 = vpop.f32.mrb[0].mxu0
    %v1895 = vadd.f32 %v1817, %v1894
    %v1896 = vpop.f32.mrb[0].mxu0
    %v1897 = vpop.f32.mrb[0].mxu0
    %v1898 = vadd.f32 %v1820, %v1897
    %v1899 = vpop.f32.mrb[0].mxu0
    %1900 = vdwg.mxu0
    %s1901 = scalar_lea.vmem %s8, 32
    %v1902 = vld [vmem:[%s1901] sm:$0xf]
    %v1903 = vld [vmem:[%s1901 + $0x4] sm:$0xf]
    %v1904 = vld [vmem:[%s1901 + $0x8] sm:$0xf]
    %v1905 = vld [vmem:[%s1901 + $0xc] sm:$0xf]
    %v1910 = vunpack.c.l.b16 %v1902
    %v1911 = vunpack.c.l.b16 %v1903
    %v1912 = vunpack.c.l.b16 %v1904
    %v1913 = vunpack.c.l.b16 %v1905
    %v1914 = vpack.c.b16 %v1911, %v1910
    %v1915 = vpack.c.b16 %v1913, %v1912
    %v1919 = vsel %vm1756, %v1732, 0
    %v1922 = vsel %vm1756, %v1733, 0
    %v1925 = vsel %vm1756, %v1734, 0
    %1927 = vmatprep.subr.bf16.mxu0 0
    %1928 = vmatpush1.bf16.msra.mxu0 %v1914
    %1929 = vmatprep.subr.bf16.mxu0 0
    %1930 = vmatpush1.bf16.msra.mxu0 %v1915
    %1931 = vmatprep.subr.bf16.mxu0 0
    %1932 = vmatpush1.bf16.msra.mxu0 0
    %1933 = vmatprep.subr.bf16.mxu0 0
    %1934 = vmatpush1.bf16.msra.mxu0 0
    %1935 = vmatprep.subr.bf16.mxu0 0
    %1936 = vmatpush1.bf16.msra.mxu0 0
    %1937 = vmatprep.subr.bf16.mxu0 0
    %1938 = vmatpush1.bf16.msra.mxu0 0
    %1939 = vmatprep.subr.bf16.mxu0 0
    %1940 = vmatpush1.bf16.msra.mxu0 0
    %1941 = vmatprep.subr.bf16.mxu0 0
    %1942 = vmatpush1.bf16.msra.mxu0 0
    %1943 = vmatprep.subr.bf16.mxu0 0
    %1944 = vmatpush1.bf16.msra.mxu0 0
    %1945 = vmatprep.subr.bf16.mxu0 0
    %1946 = vmatpush1.bf16.msra.mxu0 0
    %1947 = vmatprep.subr.bf16.mxu0 0
    %1948 = vmatpush1.bf16.msra.mxu0 0
    %1949 = vmatprep.subr.bf16.mxu0 0
    %1950 = vmatpush1.bf16.msra.mxu0 0
    %1951 = vmatprep.subr.bf16.mxu0 0
    %1952 = vmatpush1.bf16.msra.mxu0 0
    %1953 = vmatprep.subr.bf16.mxu0 0
    %1954 = vmatpush1.bf16.msra.mxu0 0
    %1955 = vmatprep.subr.bf16.mxu0 0
    %1956 = vmatpush1.bf16.msra.mxu0 0
    %1957 = vmatprep.subr.bf16.mxu0 0
    %1958 = vmatpush1.bf16.msra.mxu0 0
    %1959 = vmatprep.mubr.bf16.mxu0 0
    %1960 = vmatmul.mubr.bf16.gmra.mrb[0].mxu0 %v1919
    %v1961 = vpop.f32.mrb[0].mxu0
    %v1962 = vadd.f32 0.0, %v1961
    %v1963 = vpop.f32.mrb[0].mxu0
    %v1964 = vpop.f32.mrb[0].mxu0
    %v1965 = vadd.f32 0.0, %v1964
    %v1966 = vpop.f32.mrb[0].mxu0
    %1967 = vmatprep.mubr.bf16.mxu0 0
    %1968 = vmatmul.mubr.bf16.gmra.mrb[0].mxu0 %v1922
    %v1969 = vpop.f32.mrb[0].mxu0
    %v1970 = vadd.f32 0.0, %v1969
    %v1971 = vpop.f32.mrb[0].mxu0
    %v1972 = vpop.f32.mrb[0].mxu0
    %v1973 = vadd.f32 0.0, %v1972
    %v1974 = vpop.f32.mrb[0].mxu0
    %1975 = vmatprep.mubr.bf16.mxu0 0
    %1976 = vmatmul.mubr.bf16.gmra.mrb[0].mxu0 %v1925
    %v1977 = vpop.f32.mrb[0].mxu0
    %v1978 = vadd.f32 0.0, %v1977
    %v1979 = vpop.f32.mrb[0].mxu0
    %v1980 = vpop.f32.mrb[0].mxu0
    %v1981 = vadd.f32 0.0, %v1980
    %v1982 = vpop.f32.mrb[0].mxu0
    %1983 = vdwg.mxu0
    %v1984 = vadd.f32 %v1879, %v1962
    %v1985 = vadd.f32 %v1882, %v1965
    %v1986 = vadd.f32 %v1887, %v1970
    %v1987 = vadd.f32 %v1890, %v1973
    %v1988 = vadd.f32 %v1895, %v1978
    %v1989 = vadd.f32 %v1898, %v1981
    %v1990 = vld [vmem:[%s9] sm:$0x1]
    %v1992 = vlaneseq
    %v1993 = vshrl.u32 %v1992, 7
    %v1994 = vsub.s32 0, %v1993
    %v1995 = vrot.slane %v1990, %v1994
    %v1997 = vadd.f32 %v1984, %v1995
    %v1998 = vadd.f32 %v1985, %v1995
    %v1999 = vadd.f32 %v1986, %v1995
    %v2000 = vadd.f32 %v1987, %v1995
    %v2001 = vadd.f32 %v1988, %v1995
    %v2002 = vadd.f32 %v1989, %v1995
    %v2003 = vmax.f32 %v1997, 0.0
    %v2004 = vmax.f32 %v1998, 0.0
    %v2005 = vmax.f32 %v1999, 0.0
    %v2006 = vmax.f32 %v2000, 0.0
    %v2007 = vmax.f32 %v2001, 0.0
    %v2008 = vmax.f32 %v2002, 0.0
    %2010 = vset.pattern.permute.xlu0 0
    %2011 = vperm.xlu0 %2010, %v1682
    %v2012 = vpop.permute.xlu0 %2011
    %2015 = vset.pattern.permute.xlu0 0
    %2016 = vperm.xlu0 %2015, %v1683
    %v2017 = vpop.permute.xlu0 %2016
    %2020 = vset.pattern.permute.xlu0 0
    %2021 = vperm.xlu0 %2020, %v1684
    %v2022 = vpop.permute.xlu0 %2021
    %2025 = vset.pattern.permute.xlu0 0
    %2026 = vperm.xlu0 %2025, %v1685
    %v2027 = vpop.permute.xlu0 %2026
    %2030 = vset.pattern.permute.xlu0 0
    %2031 = vperm.xlu0 %2030, %v1686
    %v2032 = vpop.permute.xlu0 %2031
    %2035 = vset.pattern.permute.xlu0 0
    %2036 = vperm.xlu0 %2035, %v1687
    %v2037 = vpop.permute.xlu0 %2036
    %v2039 = vmul.f32 %v2003, %v2012
    %v2040 = vmul.f32 %v2004, %v2017
    %v2041 = vmul.f32 %v2005, %v2022
    %v2042 = vmul.f32 %v2006, %v2027
    %v2043 = vmul.f32 %v2007, %v2032
    %v2044 = vmul.f32 %v2008, %v2037
    %v2045 = vpack.c.bf16 %v2040, %v2039
    %v2046 = vpack.c.bf16 %v2042, %v2041
    %v2047 = vpack.c.bf16 %v2044, %v2043
    %v2054 = vrot.slane %v2039, 1
    %v2055 = vrot.slane %v2040, 1
    %v2056 = vsel %vm118, %v2054, %v2055
    %v2057 = vrot.slane %v2041, 1
    %v2058 = vsel %vm118, %v2055, %v2057
    %v2059 = vrot.slane %v2042, 1
    %v2060 = vsel %vm118, %v2057, %v2059
    %v2061 = vrot.slane %v2043, 1
    %v2062 = vsel %vm118, %v2059, %v2061
    %v2063 = vrot.slane %v2044, 1
    %v2064 = vsel %vm118, %v2061, %v2063
    %v2071 = vsel %vm118, %v2063, 0.0
    %v2072 = vpack.c.bf16 %v2058, %v2056
    %v2073 = vpack.c.bf16 %v2062, %v2060
    %v2074 = vpack.c.bf16 %v2071, %v2064
    %v2075 = vrot.slane %v2039, 2
    %v2076 = vrot.slane %v2040, 2
    %v2077 = vsel %vm154, %v2075, %v2076
    %v2078 = vrot.slane %v2041, 2
    %v2079 = vsel %vm154, %v2076, %v2078
    %v2080 = vrot.slane %v2042, 2
    %v2081 = vsel %vm154, %v2078, %v2080
    %v2082 = vrot.slane %v2043, 2
    %v2083 = vsel %vm154, %v2080, %v2082
    %v2084 = vrot.slane %v2044, 2
    %v2085 = vsel %vm154, %v2082, %v2084
    %v2092 = vsel %vm154, %v2084, 0.0
    %v2093 = vpack.c.bf16 %v2079, %v2077
    %v2094 = vpack.c.bf16 %v2083, %v2081
    %v2095 = vpack.c.bf16 %v2092, %v2085
    %v2096 = vld [vmem:[#allocation2] sm:$0xf]
    %v2097 = vld [vmem:[#allocation2 + $0x4] sm:$0xf]
    %v2098 = vld [vmem:[#allocation2 + $0x8] sm:$0xf]
    %v2099 = vld [vmem:[#allocation2 + $0xc] sm:$0xf]
    %v2100 = vld [vmem:[#allocation2 + $0x10] sm:$0xf]
    %v2101 = vld [vmem:[#allocation2 + $0x14] sm:$0xf]
    %v2102 = vld [vmem:[#allocation2 + $0x18] sm:$0xf]
    %v2103 = vld [vmem:[#allocation2 + $0x1c] sm:$0xf]
    %s2104 = scalar_lea.vmem [#allocation2], 32
    %v2105 = vld [vmem:[%s2104] sm:$0xf]
    %v2106 = vld [vmem:[%s2104 + $0x4] sm:$0xf]
    %v2107 = vld [vmem:[%s2104 + $0x8] sm:$0xf]
    %v2108 = vld [vmem:[%s2104 + $0xc] sm:$0xf]
    %v2109 = vld [vmem:[%s2104 + $0x10] sm:$0xf]
    %v2110 = vld [vmem:[%s2104 + $0x14] sm:$0xf]
    %v2111 = vld [vmem:[%s2104 + $0x18] sm:$0xf]
    %v2112 = vld [vmem:[%s2104 + $0x1c] sm:$0xf]
    %v2121 = vunpack.c.l.b16 %v2105
    %v2122 = vunpack.c.l.b16 %v2106
    %v2123 = vunpack.c.l.b16 %v2107
    %v2124 = vunpack.c.l.b16 %v2108
    %v2125 = vunpack.c.l.b16 %v2109
    %v2126 = vunpack.c.l.b16 %v2110
    %v2127 = vunpack.c.l.b16 %v2111
    %v2128 = vunpack.c.l.b16 %v2112
    %v2129 = vpack.c.b16 %v2122, %v2121
    %v2130 = vpack.c.b16 %v2124, %v2123
    %v2131 = vpack.c.b16 %v2126, %v2125
    %v2132 = vpack.c.b16 %v2128, %v2127
    %vm2137 = vcmask 523264
    %v2139 = vsel %vm2137, %v2072, 0
    %v2142 = vsel %vm2137, %v2073, 0
    %v2145 = vsel %vm2137, %v2074, 0
    %2147 = vmatprep.subr.bf16.mxu0 0
    %2148 = vmatpush1.bf16.msra.mxu0 %v2129
    %2149 = vmatprep.subr.bf16.mxu0 0
    %2150 = vmatpush1.bf16.msra.mxu0 %v2130
    %2151 = vmatprep.subr.bf16.mxu0 0
    %2152 = vmatpush1.bf16.msra.mxu0 %v2131
    %2153 = vmatprep.subr.bf16.mxu0 0
    %2154 = vmatpush1.bf16.msra.mxu0 %v2132
    %2155 = vmatprep.subr.bf16.mxu0 0
    %2156 = vmatpush1.bf16.msra.mxu0 0
    %2157 = vmatprep.subr.bf16.mxu0 0
    %2158 = vmatpush1.bf16.msra.mxu0 0
    %2159 = vmatprep.subr.bf16.mxu0 0
    %2160 = vmatpush1.bf16.msra.mxu0 0
    %2161 = vmatprep.subr.bf16.mxu0 0
    %2162 = vmatpush1.bf16.msra.mxu0 0
    %2163 = vmatprep.subr.bf16.mxu0 0
    %2164 = vmatpush1.bf16.msra.mxu0 0
    %2165 = vmatprep.subr.bf16.mxu0 0
    %2166 = vmatpush1.bf16.msra.mxu0 0
    %2167 = vmatprep.subr.bf16.mxu0 0
    %2168 = vmatpush1.bf16.msra.mxu0 0
    %2169 = vmatprep.subr.bf16.mxu0 0
    %2170 = vmatpush1.bf16.msra.mxu0 0
    %2171 = vmatprep.subr.bf16.mxu0 0
    %2172 = vmatpush1.bf16.msra.mxu0 0
    %2173 = vmatprep.subr.bf16.mxu0 0
    %2174 = vmatpush1.bf16.msra.mxu0 0
    %2175 = vmatprep.subr.bf16.mxu0 0
    %2176 = vmatpush1.bf16.msra.mxu0 0
    %2177 = vmatprep.subr.bf16.mxu0 0
    %2178 = vmatpush1.bf16.msra.mxu0 0
    %2179 = vmatprep.mubr.bf16.mxu0 0
    %2180 = vmatmul.mubr.bf16.gmra.mrb[0].mxu0 %v2139
    %v2181 = vpop.f32.mrb[0].mxu0
    %v2182 = vadd.f32 0.0, %v2181
    %v2183 = vpop.f32.mrb[0].mxu0
    %v2184 = vpop.f32.mrb[0].mxu0
    %v2185 = vadd.f32 0.0, %v2184
    %v2186 = vpop.f32.mrb[0].mxu0
    %2187 = vmatprep.mubr.bf16.mxu0 0
    %2188 = vmatmul.mubr.bf16.gmra.mrb[0].mxu0 %v2142
    %v2189 = vpop.f32.mrb[0].mxu0
    %v2190 = vpop.f32.mrb[0].mxu0
    %v2191 = vpop.f32.mrb[0].mxu0
    %v2192 = vadd.f32 0.0, %v2191
    %v2193 = vpop.f32.mrb[0].mxu0
    %2194 = vmatprep.mubr.bf16.mxu0 0
    %2195 = vmatmul.mubr.bf16.gmra.mrb[0].mxu0 %v2145
    %v2196 = vpop.f32.mrb[0].mxu0
    %v2197 = vadd.f32 0.0, %v2196
    %v2198 = vpop.f32.mrb[0].mxu0
    %v2199 = vpop.f32.mrb[0].mxu0
    %v2200 = vpop.f32.mrb[0].mxu0
    %2201 = vdwg.mxu0
    %v2210 = vunpack.c.l.b16 %v2096
    %v2211 = vunpack.c.l.b16 %v2097
    %v2212 = vunpack.c.l.b16 %v2098
    %v2213 = vunpack.c.l.b16 %v2099
    %v2214 = vunpack.c.l.b16 %v2100
    %v2215 = vunpack.c.l.b16 %v2101
    %v2216 = vunpack.c.l.b16 %v2102
    %v2217 = vunpack.c.l.b16 %v2103
    %v2218 = vpack.c.b16 %v2211, %v2210
    %v2219 = vpack.c.b16 %v2213, %v2212
    %v2220 = vpack.c.b16 %v2215, %v2214
    %v2221 = vpack.c.b16 %v2217, %v2216
    %v2227 = vsel %vm2137, %v2045, 0
    %v2230 = vsel %vm2137, %v2046, 0
    %v2233 = vsel %vm2137, %v2047, 0
    %2235 = vmatprep.subr.bf16.mxu0 0
    %2236 = vmatpush1.bf16.msra.mxu0 %v2218
    %2237 = vmatprep.subr.bf16.mxu0 0
    %2238 = vmatpush1.bf16.msra.mxu0 %v2219
    %2239 = vmatprep.subr.bf16.mxu0 0
    %2240 = vmatpush1.bf16.msra.mxu0 %v2220
    %2241 = vmatprep.subr.bf16.mxu0 0
    %2242 = vmatpush1.bf16.msra.mxu0 %v2221
    %2243 = vmatprep.subr.bf16.mxu0 0
    %2244 = vmatpush1.bf16.msra.mxu0 0
    %2245 = vmatprep.subr.bf16.mxu0 0
    %2246 = vmatpush1.bf16.msra.mxu0 0
    %2247 = vmatprep.subr.bf16.mxu0 0
    %2248 = vmatpush1.bf16.msra.mxu0 0
    %2249 = vmatprep.subr.bf16.mxu0 0
    %2250 = vmatpush1.bf16.msra.mxu0 0
    %2251 = vmatprep.subr.bf16.mxu0 0
    %2252 = vmatpush1.bf16.msra.mxu0 0
    %2253 = vmatprep.subr.bf16.mxu0 0
    %2254 = vmatpush1.bf16.msra.mxu0 0
    %2255 = vmatprep.subr.bf16.mxu0 0
    %2256 = vmatpush1.bf16.msra.mxu0 0
    %2257 = vmatprep.subr.bf16.mxu0 0
    %2258 = vmatpush1.bf16.msra.mxu0 0
    %2259 = vmatprep.subr.bf16.mxu0 0
    %2260 = vmatpush1.bf16.msra.mxu0 0
    %2261 = vmatprep.subr.bf16.mxu0 0
    %2262 = vmatpush1.bf16.msra.mxu0 0
    %2263 = vmatprep.subr.bf16.mxu0 0
    %2264 = vmatpush1.bf16.msra.mxu0 0
    %2265 = vmatprep.subr.bf16.mxu0 0
    %2266 = vmatpush1.bf16.msra.mxu0 0
    %2267 = vmatprep.mubr.bf16.mxu0 0
    %2268 = vmatmul.mubr.bf16.gmra.mrb[0].mxu0 %v2227
    %v2269 = vpop.f32.mrb[0].mxu0
    %v2270 = vadd.f32 %v2182, %v2269
    %v2271 = vpop.f32.mrb[0].mxu0
    %v2272 = vpop.f32.mrb[0].mxu0
    %v2273 = vadd.f32 %v2185, %v2272
    %v2274 = vpop.f32.mrb[0].mxu0
    %2275 = vmatprep.mubr.bf16.mxu0 0
    %2276 = vmatmul.mubr.bf16.gmra.mrb[0].mxu0 %v2230
    %v2277 = vpop.f32.mrb[0].mxu0
    %v2278 = vpop.f32.mrb[0].mxu0
    %v2279 = vpop.f32.mrb[0].mxu0
    %v2280 = vadd.f32 %v2192, %v2279
    %v2281 = vpop.f32.mrb[0].mxu0
    %2282 = vmatprep.mubr.bf16.mxu0 0
    %2283 = vmatmul.mubr.bf16.gmra.mrb[0].mxu0 %v2233
    %v2284 = vpop.f32.mrb[0].mxu0
    %v2285 = vadd.f32 %v2197, %v2284
    %v2286 = vpop.f32.mrb[0].mxu0
    %v2287 = vpop.f32.mrb[0].mxu0
    %v2288 = vpop.f32.mrb[0].mxu0
    %2289 = vdwg.mxu0
    %s2290 = scalar_lea.vmem [#allocation2], 64
    %v2291 = vld [vmem:[%s2290] sm:$0xf]
    %v2292 = vld [vmem:[%s2290 + $0x4] sm:$0xf]
    %v2293 = vld [vmem:[%s2290 + $0x8] sm:$0xf]
    %v2294 = vld [vmem:[%s2290 + $0xc] sm:$0xf]
    %v2295 = vld [vmem:[%s2290 + $0x10] sm:$0xf]
    %v2296 = vld [vmem:[%s2290 + $0x14] sm:$0xf]
    %v2297 = vld [vmem:[%s2290 + $0x18] sm:$0xf]
    %v2298 = vld [vmem:[%s2290 + $0x1c] sm:$0xf]
    %v2307 = vunpack.c.l.b16 %v2291
    %v2308 = vunpack.c.l.b16 %v2292
    %v2309 = vunpack.c.l.b16 %v2293
    %v2310 = vunpack.c.l.b16 %v2294
    %v2311 = vunpack.c.l.b16 %v2295
    %v2312 = vunpack.c.l.b16 %v2296
    %v2313 = vunpack.c.l.b16 %v2297
    %v2314 = vunpack.c.l.b16 %v2298
    %v2315 = vpack.c.b16 %v2308, %v2307
    %v2316 = vpack.c.b16 %v2310, %v2309
    %v2317 = vpack.c.b16 %v2312, %v2311
    %v2318 = vpack.c.b16 %v2314, %v2313
    %v2324 = vsel %vm2137, %v2093, 0
    %v2327 = vsel %vm2137, %v2094, 0
    %v2330 = vsel %vm2137, %v2095, 0
    %2332 = vmatprep.subr.bf16.mxu0 0
    %2333 = vmatpush1.bf16.msra.mxu0 %v2315
    %2334 = vmatprep.subr.bf16.mxu0 0
    %2335 = vmatpush1.bf16.msra.mxu0 %v2316
    %2336 = vmatprep.subr.bf16.mxu0 0
    %2337 = vmatpush1.bf16.msra.mxu0 %v2317
    %2338 = vmatprep.subr.bf16.mxu0 0
    %2339 = vmatpush1.bf16.msra.mxu0 %v2318
    %2340 = vmatprep.subr.bf16.mxu0 0
    %2341 = vmatpush1.bf16.msra.mxu0 0
    %2342 = vmatprep.subr.bf16.mxu0 0
    %2343 = vmatpush1.bf16.msra.mxu0 0
    %2344 = vmatprep.subr.bf16.mxu0 0
    %2345 = vmatpush1.bf16.msra.mxu0 0
    %2346 = vmatprep.subr.bf16.mxu0 0
    %2347 = vmatpush1.bf16.msra.mxu0 0
    %2348 = vmatprep.subr.bf16.mxu0 0
    %2349 = vmatpush1.bf16.msra.mxu0 0
    %2350 = vmatprep.subr.bf16.mxu0 0
    %2351 = vmatpush1.bf16.msra.mxu0 0
    %2352 = vmatprep.subr.bf16.mxu0 0
    %2353 = vmatpush1.bf16.msra.mxu0 0
    %2354 = vmatprep.subr.bf16.mxu0 0
    %2355 = vmatpush1.bf16.msra.mxu0 0
    %2356 = vmatprep.subr.bf16.mxu0 0
    %2357 = vmatpush1.bf16.msra.mxu0 0
    %2358 = vmatprep.subr.bf16.mxu0 0
    %2359 = vmatpush1.bf16.msra.mxu0 0
    %2360 = vmatprep.subr.bf16.mxu0 0
    %2361 = vmatpush1.bf16.msra.mxu0 0
    %2362 = vmatprep.subr.bf16.mxu0 0
    %2363 = vmatpush1.bf16.msra.mxu0 0
    %2364 = vmatprep.mubr.bf16.mxu0 0
    %2365 = vmatmul.mubr.bf16.gmra.mrb[0].mxu0 %v2324
    %v2366 = vpop.f32.mrb[0].mxu0
    %v2367 = vadd.f32 0.0, %v2366
    %v2368 = vpop.f32.mrb[0].mxu0
    %v2369 = vpop.f32.mrb[0].mxu0
    %v2370 = vadd.f32 0.0, %v2369
    %v2371 = vpop.f32.mrb[0].mxu0
    %2372 = vmatprep.mubr.bf16.mxu0 0
    %2373 = vmatmul.mubr.bf16.gmra.mrb[0].mxu0 %v2327
    %v2374 = vpop.f32.mrb[0].mxu0
    %v2375 = vpop.f32.mrb[0].mxu0
    %v2376 = vpop.f32.mrb[0].mxu0
    %v2377 = vadd.f32 0.0, %v2376
    %v2378 = vpop.f32.mrb[0].mxu0
    %2379 = vmatprep.mubr.bf16.mxu0 0
    %2380 = vmatmul.mubr.bf16.gmra.mrb[0].mxu0 %v2330
    %v2381 = vpop.f32.mrb[0].mxu0
    %v2382 = vadd.f32 0.0, %v2381
    %v2383 = vpop.f32.mrb[0].mxu0
    %v2384 = vpop.f32.mrb[0].mxu0
    %v2385 = vpop.f32.mrb[0].mxu0
    %2386 = vdwg.mxu0
    %v2387 = vadd.f32 %v2270, %v2367
    %v2388 = vadd.f32 %v2273, %v2370
    %v2389 = vadd.f32 %v2280, %v2377
    %v2390 = vadd.f32 %v2285, %v2382
    %v2391 = vld [vmem:[%s11] sm:$0x1]
    %v2393 = vlaneseq
    %v2394 = vshrl.u32 %v2393, 7
    %v2395 = vsub.s32 0, %v2394
    %v2396 = vrot.slane %v2391, %v2395
    %v2398 = vadd.f32 %v2387, %v2396
    %v2399 = vadd.f32 %v2388, %v2396
    %v2400 = vadd.f32 %v2389, %v2396
    %v2401 = vadd.f32 %v2390, %v2396
    %v2402 = vmax.f32 %v2398, 0.0
    %v2403 = vmax.f32 %v2399, 0.0
    %v2404 = vmax.f32 %v2400, 0.0
    %v2405 = vmax.f32 %v2401, 0.0
    %v2406 = vsel %vm210, %v2402, -inf
    %v2407 = vrot.slane %v2406, 4
    %v2408 = vmax.f32 %v2406, %v2407
    %v2409 = vrot.slane %v2408, 2
    %v2410 = vmax.f32 %v2408, %v2409
    %v2411 = vrot.slane %v2410, 1
    %v2412 = vmax.f32 %v2410, %v2411
    %v2413 = vsel %vm210, %v2404, -inf
    %v2414 = vrot.slane %v2413, 4
    %v2415 = vmax.f32 %v2413, %v2414
    %v2416 = vrot.slane %v2415, 2
    %v2417 = vmax.f32 %v2415, %v2416
    %v2418 = vrot.slane %v2417, 1
    %v2419 = vmax.f32 %v2417, %v2418
    %vm2420 = vcmask 1046531
    %v2421 = vsel %vm2420, %v2402, -inf
    %v2422 = vrot.slane %v2421, 4
    %v2423 = vmax.f32 %v2421, %v2422
    %v2424 = vrot.slane %v2423, 2
    %v2425 = vmax.f32 %v2423, %v2424
    %v2426 = vrot.slane %v2425, 1
    %v2427 = vmax.f32 %v2425, %v2426
    %v2428 = vsel %vm2420, %v2404, -inf
    %v2429 = vrot.slane %v2428, 4
    %v2430 = vmax.f32 %v2428, %v2429
    %v2431 = vrot.slane %v2430, 2
    %v2432 = vmax.f32 %v2430, %v2431
    %v2433 = vrot.slane %v2432, 1
    %v2434 = vmax.f32 %v2432, %v2433
    %v2435 = vsel %vm1645, %v2402, -inf
    %v2436 = vsel %vm209, %v2403, -inf
    %v2437 = vmax.f32 %v2435, %v2436
    %v2438 = vrot.slane %v2437, 4
    %v2439 = vmax.f32 %v2437, %v2438
    %v2440 = vrot.slane %v2439, 2
    %v2441 = vmax.f32 %v2439, %v2440
    %v2442 = vrot.slane %v2441, 1
    %v2443 = vmax.f32 %v2441, %v2442
    %v2444 = vsel %vm1645, %v2404, -inf
    %v2445 = vsel %vm209, %v2405, -inf
    %v2446 = vmax.f32 %v2444, %v2445
    %v2447 = vrot.slane %v2446, 4
    %v2448 = vmax.f32 %v2446, %v2447
    %v2449 = vrot.slane %v2448, 2
    %v2450 = vmax.f32 %v2448, %v2449
    %v2451 = vrot.slane %v2450, 1
    %v2452 = vmax.f32 %v2450, %v2451
    %vm2453 = vcmask 1045506
    %v2454 = vsel %vm2453, %v2403, -inf
    %v2455 = vrot.slane %v2454, 4
    %v2456 = vmax.f32 %v2454, %v2455
    %v2457 = vrot.slane %v2456, 2
    %v2458 = vmax.f32 %v2456, %v2457
    %v2459 = vrot.slane %v2458, 1
    %v2460 = vmax.f32 %v2458, %v2459
    %v2461 = vsel %vm2453, %v2405, -inf
    %v2462 = vrot.slane %v2461, 4
    %v2463 = vmax.f32 %v2461, %v2462
    %v2464 = vrot.slane %v2463, 2
    %v2465 = vmax.f32 %v2463, %v2464
    %v2466 = vrot.slane %v2465, 1
    %v2467 = vmax.f32 %v2465, %v2466
    %v2470 = vsel %vm1633, %v2419, %v2412
    %v2474 = vsel %vm1633, %v2434, %v2427
    %v2478 = vsel %vm1633, %v2452, %v2443
    %v2482 = vsel %vm1633, %v2467, %v2460
    %v2484 = vld [vmem:[#allocation5] sm:$0xff]
    %v2485 = vld [vmem:[#allocation5 + $0x8] sm:$0xff]
    %v2486 = vld [vmem:[#allocation5 + $0x10] sm:$0xff]
    %v2487 = vld [vmem:[#allocation5 + $0x18] sm:$0xff]
    %v2488 = vld [vmem:[#allocation5 + $0x20] sm:$0xff]
    %v2489 = vld [vmem:[#allocation5 + $0x28] sm:$0xff]
    %v2490 = vld [vmem:[#allocation5 + $0x30] sm:$0xff]
    %v2491 = vld [vmem:[#allocation5 + $0x38] sm:$0xff]
    %v2492 = vld [vmem:[#allocation5 + $0x40] sm:$0xff]
    %v2493 = vld [vmem:[#allocation5 + $0x48] sm:$0xff]
    %v2494 = vld [vmem:[#allocation5 + $0x50] sm:$0xff]
    %v2495 = vld [vmem:[#allocation5 + $0x58] sm:$0xff]
    %v2496 = vld [vmem:[#allocation5 + $0x60] sm:$0xff]
    %v2497 = vld [vmem:[#allocation5 + $0x68] sm:$0xff]
    %v2498 = vld [vmem:[#allocation5 + $0x70] sm:$0xff]
    %v2499 = vld [vmem:[#allocation5 + $0x78] sm:$0xff]
    %v2500 = vld [vmem:[#allocation5 + $0x80] sm:$0xff]
    %v2501 = vld [vmem:[#allocation5 + $0x88] sm:$0xff]
    %v2502 = vld [vmem:[#allocation5 + $0x90] sm:$0xff]
    %v2503 = vld [vmem:[#allocation5 + $0x98] sm:$0xff]
    %v2504 = vld [vmem:[#allocation5 + $0xa0] sm:$0xff]
    %v2505 = vld [vmem:[#allocation5 + $0xa8] sm:$0xff]
    %v2506 = vld [vmem:[#allocation5 + $0xb0] sm:$0xff]
    %v2507 = vld [vmem:[#allocation5 + $0xb8] sm:$0xff]
    %v2508 = vld [vmem:[#allocation5 + $0xc0] sm:$0xff]
    %v2509 = vld [vmem:[#allocation5 + $0xc8] sm:$0xff]
    %v2510 = vld [vmem:[#allocation5 + $0xd0] sm:$0xff]
    %v2511 = vld [vmem:[#allocation5 + $0xd8] sm:$0xff]
    %v2512 = vld [vmem:[#allocation5 + $0xe0] sm:$0xff]
    %v2513 = vld [vmem:[#allocation5 + $0xe8] sm:$0xff]
    %v2514 = vld [vmem:[#allocation5 + $0xf0] sm:$0xff]
    %v2515 = vld [vmem:[#allocation5 + $0xf8] sm:$0xff]
    %v2516 = vld [vmem:[#allocation5 + $0x100] sm:$0xff]
    %v2517 = vld [vmem:[#allocation5 + $0x108] sm:$0xff]
    %v2518 = vld [vmem:[#allocation5 + $0x110] sm:$0xff]
    %v2519 = vld [vmem:[#allocation5 + $0x118] sm:$0xff]
    %v2520 = vld [vmem:[#allocation5 + $0x120] sm:$0xff]
    %v2521 = vld [vmem:[#allocation5 + $0x128] sm:$0xff]
    %v2522 = vld [vmem:[#allocation5 + $0x130] sm:$0xff]
    %v2523 = vld [vmem:[#allocation5 + $0x138] sm:$0xff]
    %v2524 = vld [vmem:[#allocation5 + $0x140] sm:$0xff]
    %v2525 = vld [vmem:[#allocation5 + $0x148] sm:$0xff]
    %v2526 = vld [vmem:[#allocation5 + $0x150] sm:$0xff]
    %v2527 = vld [vmem:[#allocation5 + $0x158] sm:$0xff]
    %v2528 = vld [vmem:[#allocation5 + $0x160] sm:$0xff]
    %v2529 = vld [vmem:[#allocation5 + $0x168] sm:$0xff]
    %v2530 = vld [vmem:[#allocation5 + $0x170] sm:$0xff]
    %v2531 = vld [vmem:[#allocation5 + $0x178] sm:$0xff]
    %v2532 = vld [vmem:[#allocation5 + $0x180] sm:$0xff]
    %v2533 = vld [vmem:[#allocation5 + $0x188] sm:$0xff]
    %v2534 = vld [vmem:[#allocation5 + $0x190] sm:$0xff]
    %v2535 = vld [vmem:[#allocation5 + $0x198] sm:$0xff]
    %v2536 = vld [vmem:[#allocation5 + $0x1a0] sm:$0xff]
    %v2537 = vld [vmem:[#allocation5 + $0x1a8] sm:$0xff]
    %v2538 = vld [vmem:[#allocation5 + $0x1b0] sm:$0xff]
    %v2539 = vld [vmem:[#allocation5 + $0x1b8] sm:$0xff]
    %v2540 = vld [vmem:[#allocation5 + $0x1c0] sm:$0xff]
    %v2541 = vld [vmem:[#allocation5 + $0x1c8] sm:$0xff]
    %v2542 = vld [vmem:[#allocation5 + $0x1d0] sm:$0xff]
    %v2543 = vld [vmem:[#allocation5 + $0x1d8] sm:$0xff]
    %v2544 = vld [vmem:[#allocation5 + $0x1e0] sm:$0xff]
    %v2545 = vld [vmem:[#allocation5 + $0x1e8] sm:$0xff]
    %v2546 = vld [vmem:[#allocation5 + $0x1f0] sm:$0xff]
    %v2547 = vld [vmem:[#allocation5 + $0x1f8] sm:$0xff]
    %v2548 = vld [vmem:[#allocation5 + $0x200] sm:$0xff]
    %v2549 = vld [vmem:[#allocation5 + $0x208] sm:$0xff]
    %v2550 = vld [vmem:[#allocation5 + $0x210] sm:$0xff]
    %v2551 = vld [vmem:[#allocation5 + $0x218] sm:$0xff]
    %v2552 = vld [vmem:[#allocation5 + $0x220] sm:$0xff]
    %v2553 = vld [vmem:[#allocation5 + $0x228] sm:$0xff]
    %v2554 = vld [vmem:[#allocation5 + $0x230] sm:$0xff]
    %v2555 = vld [vmem:[#allocation5 + $0x238] sm:$0xff]
    %v2556 = vld [vmem:[#allocation5 + $0x240] sm:$0xff]
    %v2557 = vld [vmem:[#allocation5 + $0x248] sm:$0xff]
    %v2558 = vld [vmem:[#allocation5 + $0x250] sm:$0xff]
    %v2559 = vld [vmem:[#allocation5 + $0x258] sm:$0xff]
    %v2560 = vld [vmem:[#allocation5 + $0x260] sm:$0xff]
    %v2561 = vld [vmem:[#allocation5 + $0x268] sm:$0xff]
    %v2562 = vld [vmem:[#allocation5 + $0x270] sm:$0xff]
    %v2563 = vld [vmem:[#allocation5 + $0x278] sm:$0xff]
    %v2564 = vld [vmem:[#allocation5 + $0x280] sm:$0xff]
    %v2565 = vld [vmem:[#allocation5 + $0x288] sm:$0xff]
    %v2566 = vld [vmem:[#allocation5 + $0x290] sm:$0xff]
    %v2567 = vld [vmem:[#allocation5 + $0x298] sm:$0xff]
    %v2568 = vld [vmem:[#allocation5 + $0x2a0] sm:$0xff]
    %v2569 = vld [vmem:[#allocation5 + $0x2a8] sm:$0xff]
    %v2570 = vld [vmem:[#allocation5 + $0x2b0] sm:$0xff]
    %v2571 = vld [vmem:[#allocation5 + $0x2b8] sm:$0xff]
    %v2572 = vld [vmem:[#allocation5 + $0x2c0] sm:$0xff]
    %v2573 = vld [vmem:[#allocation5 + $0x2c8] sm:$0xff]
    %v2574 = vld [vmem:[#allocation5 + $0x2d0] sm:$0xff]
    %v2575 = vld [vmem:[#allocation5 + $0x2d8] sm:$0xff]
    %v2576 = vld [vmem:[#allocation5 + $0x2e0] sm:$0xff]
    %v2577 = vld [vmem:[#allocation5 + $0x2e8] sm:$0xff]
    %v2578 = vld [vmem:[#allocation5 + $0x2f0] sm:$0xff]
    %v2579 = vld [vmem:[#allocation5 + $0x2f8] sm:$0xff]
    %v2580 = vld [vmem:[#allocation5 + $0x300] sm:$0xff]
    %v2581 = vld [vmem:[#allocation5 + $0x308] sm:$0xff]
    %v2582 = vld [vmem:[#allocation5 + $0x310] sm:$0xff]
    %v2583 = vld [vmem:[#allocation5 + $0x318] sm:$0xff]
    %v2584 = vld [vmem:[#allocation5 + $0x320] sm:$0xff]
    %v2585 = vld [vmem:[#allocation5 + $0x328] sm:$0xff]
    %v2586 = vld [vmem:[#allocation5 + $0x330] sm:$0xff]
    %v2587 = vld [vmem:[#allocation5 + $0x338] sm:$0xff]
    %v2588 = vld [vmem:[#allocation5 + $0x340] sm:$0xff]
    %v2589 = vld [vmem:[#allocation5 + $0x348] sm:$0xff]
    %v2590 = vld [vmem:[#allocation5 + $0x350] sm:$0xff]
    %v2591 = vld [vmem:[#allocation5 + $0x358] sm:$0xff]
    %v2592 = vld [vmem:[#allocation5 + $0x360] sm:$0xff]
    %v2593 = vld [vmem:[#allocation5 + $0x368] sm:$0xff]
    %v2594 = vld [vmem:[#allocation5 + $0x370] sm:$0xff]
    %v2595 = vld [vmem:[#allocation5 + $0x378] sm:$0xff]
    %v2596 = vld [vmem:[#allocation5 + $0x380] sm:$0xff]
    %v2597 = vld [vmem:[#allocation5 + $0x388] sm:$0xff]
    %v2598 = vld [vmem:[#allocation5 + $0x390] sm:$0xff]
    %v2599 = vld [vmem:[#allocation5 + $0x398] sm:$0xff]
    %v2600 = vld [vmem:[#allocation5 + $0x3a0] sm:$0xff]
    %v2601 = vld [vmem:[#allocation5 + $0x3a8] sm:$0xff]
    %v2602 = vld [vmem:[#allocation5 + $0x3b0] sm:$0xff]
    %v2603 = vld [vmem:[#allocation5 + $0x3b8] sm:$0xff]
    %v2604 = vld [vmem:[#allocation5 + $0x3c0] sm:$0xff]
    %v2605 = vld [vmem:[#allocation5 + $0x3c8] sm:$0xff]
    %v2606 = vld [vmem:[#allocation5 + $0x3d0] sm:$0xff]
    %v2607 = vld [vmem:[#allocation5 + $0x3d8] sm:$0xff]
    %v2608 = vld [vmem:[#allocation5 + $0x3e0] sm:$0xff]
    %v2609 = vld [vmem:[#allocation5 + $0x3e8] sm:$0xff]
    %v2610 = vld [vmem:[#allocation5 + $0x3f0] sm:$0xff]
    %v2611 = vld [vmem:[#allocation5 + $0x3f8] sm:$0xff]
    %v2612 = vld [vmem:[%s13] sm:$0x3]
    %v2614 = vlaneseq
    %v2615 = vshrl.u32 %v2614, 7
    %v2616 = vsub.s32 0, %v2615
    %v2617 = vrot.slane %v2612, %v2616
    %v2618 = vlaneseq
    %v2619 = vshrl.u32 %v2618, 7
    %v2620 = vsub.s32 1, %v2619
    %v2621 = vrot.slane %v2612, %v2620
    %2624 = vmatprep.subr.mxu0 %v2485
    %2625 = vmatpush1.msra.mxu0 %v2484
    %2626 = vmatprep.subr.mxu0 %v2487
    %2627 = vmatpush1.msra.mxu0 %v2486
    %2628 = vmatprep.subr.mxu0 %v2489
    %2629 = vmatpush1.msra.mxu0 %v2488
    %2630 = vmatprep.subr.mxu0 %v2491
    %2631 = vmatpush1.msra.mxu0 %v2490
    %2632 = vmatprep.subr.mxu0 %v2493
    %2633 = vmatpush1.msra.mxu0 %v2492
    %2634 = vmatprep.subr.mxu0 %v2495
    %2635 = vmatpush1.msra.mxu0 %v2494
    %2636 = vmatprep.subr.mxu0 %v2497
    %2637 = vmatpush1.msra.mxu0 %v2496
    %2638 = vmatprep.subr.mxu0 %v2499
    %2639 = vmatpush1.msra.mxu0 %v2498
    %2640 = vmatprep.subr.mxu0 %v2501
    %2641 = vmatpush1.msra.mxu0 %v2500
    %2642 = vmatprep.subr.mxu0 %v2503
    %2643 = vmatpush1.msra.mxu0 %v2502
    %2644 = vmatprep.subr.mxu0 %v2505
    %2645 = vmatpush1.msra.mxu0 %v2504
    %2646 = vmatprep.subr.mxu0 %v2507
    %2647 = vmatpush1.msra.mxu0 %v2506
    %2648 = vmatprep.subr.mxu0 %v2509
    %2649 = vmatpush1.msra.mxu0 %v2508
    %2650 = vmatprep.subr.mxu0 %v2511
    %2651 = vmatpush1.msra.mxu0 %v2510
    %2652 = vmatprep.subr.mxu0 %v2513
    %2653 = vmatpush1.msra.mxu0 %v2512
    %2654 = vmatprep.subr.mxu0 %v2515
    %2655 = vmatpush1.msra.mxu0 %v2514
    %2656 = vmatprep.subr.mxu0 %v2517
    %2657 = vmatpush1.msra.mxu0 %v2516
    %2658 = vmatprep.subr.mxu0 %v2519
    %2659 = vmatpush1.msra.mxu0 %v2518
    %2660 = vmatprep.subr.mxu0 %v2521
    %2661 = vmatpush1.msra.mxu0 %v2520
    %2662 = vmatprep.subr.mxu0 %v2523
    %2663 = vmatpush1.msra.mxu0 %v2522
    %2664 = vmatprep.subr.mxu0 %v2525
    %2665 = vmatpush1.msra.mxu0 %v2524
    %2666 = vmatprep.subr.mxu0 %v2527
    %2667 = vmatpush1.msra.mxu0 %v2526
    %2668 = vmatprep.subr.mxu0 %v2529
    %2669 = vmatpush1.msra.mxu0 %v2528
    %2670 = vmatprep.subr.mxu0 %v2531
    %2671 = vmatpush1.msra.mxu0 %v2530
    %2672 = vmatprep.subr.mxu0 %v2533
    %2673 = vmatpush1.msra.mxu0 %v2532
    %2674 = vmatprep.subr.mxu0 %v2535
    %2675 = vmatpush1.msra.mxu0 %v2534
    %2676 = vmatprep.subr.mxu0 %v2537
    %2677 = vmatpush1.msra.mxu0 %v2536
    %2678 = vmatprep.subr.mxu0 %v2539
    %2679 = vmatpush1.msra.mxu0 %v2538
    %2680 = vmatprep.subr.mxu0 %v2541
    %2681 = vmatpush1.msra.mxu0 %v2540
    %2682 = vmatprep.subr.mxu0 %v2543
    %2683 = vmatpush1.msra.mxu0 %v2542
    %2684 = vmatprep.subr.mxu0 %v2545
    %2685 = vmatpush1.msra.mxu0 %v2544
    %2686 = vmatprep.subr.mxu0 %v2547
    %2687 = vmatpush1.msra.mxu0 %v2546
    %2688 = vmatprep.mubr.f32.mxu0 %v2474
    %2689 = vmatmul.mubr.f32.gmra.mrb[0].mxu0 %v2470
    %v2690 = vpop.f32.mrb[0].mxu0
    %v2691 = vadd.f32 %v2617, %v2690
    %v2692 = vpop.f32.mrb[0].mxu0
    %v2693 = vadd.f32 %v2621, %v2692
    %2694 = vdwg.mxu0
    %2695 = vmatprep.subr.mxu0 %v2549
    %2696 = vmatpush1.msra.mxu0 %v2548
    %2697 = vmatprep.subr.mxu0 %v2551
    %2698 = vmatpush1.msra.mxu0 %v2550
    %2699 = vmatprep.subr.mxu0 %v2553
    %2700 = vmatpush1.msra.mxu0 %v2552
    %2701 = vmatprep.subr.mxu0 %v2555
    %2702 = vmatpush1.msra.mxu0 %v2554
    %2703 = vmatprep.subr.mxu0 %v2557
    %2704 = vmatpush1.msra.mxu0 %v2556
    %2705 = vmatprep.subr.mxu0 %v2559
    %2706 = vmatpush1.msra.mxu0 %v2558
    %2707 = vmatprep.subr.mxu0 %v2561
    %2708 = vmatpush1.msra.mxu0 %v2560
    %2709 = vmatprep.subr.mxu0 %v2563
    %2710 = vmatpush1.msra.mxu0 %v2562
    %2711 = vmatprep.subr.mxu0 %v2565
    %2712 = vmatpush1.msra.mxu0 %v2564
    %2713 = vmatprep.subr.mxu0 %v2567
    %2714 = vmatpush1.msra.mxu0 %v2566
    %2715 = vmatprep.subr.mxu0 %v2569
    %2716 = vmatpush1.msra.mxu0 %v2568
    %2717 = vmatprep.subr.mxu0 %v2571
    %2718 = vmatpush1.msra.mxu0 %v2570
    %2719 = vmatprep.subr.mxu0 %v2573
    %2720 = vmatpush1.msra.mxu0 %v2572
    %2721 = vmatprep.subr.mxu0 %v2575
    %2722 = vmatpush1.msra.mxu0 %v2574
    %2723 = vmatprep.subr.mxu0 %v2577
    %2724 = vmatpush1.msra.mxu0 %v2576
    %2725 = vmatprep.subr.mxu0 %v2579
    %2726 = vmatpush1.msra.mxu0 %v2578
    %2727 = vmatprep.subr.mxu0 %v2581
    %2728 = vmatpush1.msra.mxu0 %v2580
    %2729 = vmatprep.subr.mxu0 %v2583
    %2730 = vmatpush1.msra.mxu0 %v2582
    %2731 = vmatprep.subr.mxu0 %v2585
    %2732 = vmatpush1.msra.mxu0 %v2584
    %2733 = vmatprep.subr.mxu0 %v2587
    %2734 = vmatpush1.msra.mxu0 %v2586
    %2735 = vmatprep.subr.mxu0 %v2589
    %2736 = vmatpush1.msra.mxu0 %v2588
    %2737 = vmatprep.subr.mxu0 %v2591
    %2738 = vmatpush1.msra.mxu0 %v2590
    %2739 = vmatprep.subr.mxu0 %v2593
    %2740 = vmatpush1.msra.mxu0 %v2592
    %2741 = vmatprep.subr.mxu0 %v2595
    %2742 = vmatpush1.msra.mxu0 %v2594
    %2743 = vmatprep.subr.mxu0 %v2597
    %2744 = vmatpush1.msra.mxu0 %v2596
    %2745 = vmatprep.subr.mxu0 %v2599
    %2746 = vmatpush1.msra.mxu0 %v2598
    %2747 = vmatprep.subr.mxu0 %v2601
    %2748 = vmatpush1.msra.mxu0 %v2600
    %2749 = vmatprep.subr.mxu0 %v2603
    %2750 = vmatpush1.msra.mxu0 %v2602
    %2751 = vmatprep.subr.mxu0 %v2605
    %2752 = vmatpush1.msra.mxu0 %v2604
    %2753 = vmatprep.subr.mxu0 %v2607
    %2754 = vmatpush1.msra.mxu0 %v2606
    %2755 = vmatprep.subr.mxu0 %v2609
    %2756 = vmatpush1.msra.mxu0 %v2608
    %2757 = vmatprep.subr.mxu0 %v2611
    %2758 = vmatpush1.msra.mxu0 %v2610
    %2759 = vmatprep.mubr.f32.mxu0 %v2482
    %2760 = vmatmul.mubr.f32.gmra.mrb[0].mxu0 %v2478
    %v2761 = vpop.f32.mrb[0].mxu0
    %v2762 = vadd.f32 %v2691, %v2761
    %v2763 = vpop.f32.mrb[0].mxu0
    %v2764 = vadd.f32 %v2693, %v2763
    %2765 = vdwg.mxu0
    %v2766 = vmax.f32 %v2762, 0.0
    %v2767 = vmax.f32 %v2764, 0.0
    %v2768 = vld [vmem:[%s14] sm:$0xff]
    %v2769 = vld [vmem:[%s14 + $0x8] sm:$0xff]
    %v2770 = vld [vmem:[%s14 + $0x10] sm:$0xff]
    %v2771 = vld [vmem:[%s14 + $0x18] sm:$0xff]
    %v2772 = vld [vmem:[%s14 + $0x20] sm:$0xff]
    %v2773 = vld [vmem:[%s14 + $0x28] sm:$0xff]
    %v2774 = vld [vmem:[%s14 + $0x30] sm:$0xff]
    %v2775 = vld [vmem:[%s14 + $0x38] sm:$0xff]
    %v2776 = vld [vmem:[%s14 + $0x40] sm:$0xff]
    %v2777 = vld [vmem:[%s14 + $0x48] sm:$0xff]
    %v2778 = vld [vmem:[%s14 + $0x50] sm:$0xff]
    %v2779 = vld [vmem:[%s14 + $0x58] sm:$0xff]
    %v2780 = vld [vmem:[%s14 + $0x60] sm:$0xff]
    %v2781 = vld [vmem:[%s14 + $0x68] sm:$0xff]
    %v2782 = vld [vmem:[%s14 + $0x70] sm:$0xff]
    %v2783 = vld [vmem:[%s14 + $0x78] sm:$0xff]
    %v2784 = vld [vmem:[%s14 + $0x80] sm:$0xff]
    %v2785 = vld [vmem:[%s14 + $0x88] sm:$0xff]
    %v2786 = vld [vmem:[%s14 + $0x90] sm:$0xff]
    %v2787 = vld [vmem:[%s14 + $0x98] sm:$0xff]
    %v2788 = vld [vmem:[%s14 + $0xa0] sm:$0xff]
    %v2789 = vld [vmem:[%s14 + $0xa8] sm:$0xff]
    %v2790 = vld [vmem:[%s14 + $0xb0] sm:$0xff]
    %v2791 = vld [vmem:[%s14 + $0xb8] sm:$0xff]
    %v2792 = vld [vmem:[%s14 + $0xc0] sm:$0xff]
    %v2793 = vld [vmem:[%s14 + $0xc8] sm:$0xff]
    %v2794 = vld [vmem:[%s14 + $0xd0] sm:$0xff]
    %v2795 = vld [vmem:[%s14 + $0xd8] sm:$0xff]
    %v2796 = vld [vmem:[%s14 + $0xe0] sm:$0xff]
    %v2797 = vld [vmem:[%s14 + $0xe8] sm:$0xff]
    %v2798 = vld [vmem:[%s14 + $0xf0] sm:$0xff]
    %v2799 = vld [vmem:[%s14 + $0xf8] sm:$0xff]
    %v2800 = vld [vmem:[%s15] sm:$0x1]
    %v2802 = vlaneseq
    %v2803 = vshrl.u32 %v2802, 7
    %v2804 = vsub.s32 0, %v2803
    %v2805 = vrot.slane %v2800, %v2804
    %2807 = vmatprep.subr.mxu0 0.0
    %2808 = vmatpush1.msra.mxu0 %v2768
    %2809 = vmatprep.subr.mxu0 0.0
    %2810 = vmatpush1.msra.mxu0 %v2769
    %2811 = vmatprep.subr.mxu0 0.0
    %2812 = vmatpush1.msra.mxu0 %v2770
    %2813 = vmatprep.subr.mxu0 0.0
    %2814 = vmatpush1.msra.mxu0 %v2771
    %2815 = vmatprep.subr.mxu0 0.0
    %2816 = vmatpush1.msra.mxu0 %v2772
    %2817 = vmatprep.subr.mxu0 0.0
    %2818 = vmatpush1.msra.mxu0 %v2773
    %2819 = vmatprep.subr.mxu0 0.0
    %2820 = vmatpush1.msra.mxu0 %v2774
    %2821 = vmatprep.subr.mxu0 0.0
    %2822 = vmatpush1.msra.mxu0 %v2775
    %2823 = vmatprep.subr.mxu0 0.0
    %2824 = vmatpush1.msra.mxu0 %v2776
    %2825 = vmatprep.subr.mxu0 0.0
    %2826 = vmatpush1.msra.mxu0 %v2777
    %2827 = vmatprep.subr.mxu0 0.0
    %2828 = vmatpush1.msra.mxu0 %v2778
    %2829 = vmatprep.subr.mxu0 0.0
    %2830 = vmatpush1.msra.mxu0 %v2779
    %2831 = vmatprep.subr.mxu0 0.0
    %2832 = vmatpush1.msra.mxu0 %v2780
    %2833 = vmatprep.subr.mxu0 0.0
    %2834 = vmatpush1.msra.mxu0 %v2781
    %2835 = vmatprep.subr.mxu0 0.0
    %2836 = vmatpush1.msra.mxu0 %v2782
    %2837 = vmatprep.subr.mxu0 0.0
    %2838 = vmatpush1.msra.mxu0 %v2783
    %2839 = vmatprep.subr.mxu0 0.0
    %2840 = vmatpush1.msra.mxu0 %v2784
    %2841 = vmatprep.subr.mxu0 0.0
    %2842 = vmatpush1.msra.mxu0 %v2785
    %2843 = vmatprep.subr.mxu0 0.0
    %2844 = vmatpush1.msra.mxu0 %v2786
    %2845 = vmatprep.subr.mxu0 0.0
    %2846 = vmatpush1.msra.mxu0 %v2787
    %2847 = vmatprep.subr.mxu0 0.0
    %2848 = vmatpush1.msra.mxu0 %v2788
    %2849 = vmatprep.subr.mxu0 0.0
    %2850 = vmatpush1.msra.mxu0 %v2789
    %2851 = vmatprep.subr.mxu0 0.0
    %2852 = vmatpush1.msra.mxu0 %v2790
    %2853 = vmatprep.subr.mxu0 0.0
    %2854 = vmatpush1.msra.mxu0 %v2791
    %2855 = vmatprep.subr.mxu0 0.0
    %2856 = vmatpush1.msra.mxu0 %v2792
    %2857 = vmatprep.subr.mxu0 0.0
    %2858 = vmatpush1.msra.mxu0 %v2793
    %2859 = vmatprep.subr.mxu0 0.0
    %2860 = vmatpush1.msra.mxu0 %v2794
    %2861 = vmatprep.subr.mxu0 0.0
    %2862 = vmatpush1.msra.mxu0 %v2795
    %2863 = vmatprep.subr.mxu0 0.0
    %2864 = vmatpush1.msra.mxu0 %v2796
    %2865 = vmatprep.subr.mxu0 0.0
    %2866 = vmatpush1.msra.mxu0 %v2797
    %2867 = vmatprep.subr.mxu0 0.0
    %2868 = vmatpush1.msra.mxu0 %v2798
    %2869 = vmatprep.subr.mxu0 0.0
    %2870 = vmatpush1.msra.mxu0 %v2799
    %2871 = vmatprep.mubr.f32.mxu0 %v2767
    %2872 = vmatmul.mubr.f32.gmra.mrb[0].mxu0 %v2766
    %v2873 = vpop.f32.mrb[0].mxu0
    %v2874 = vadd.f32 %v2805, %v2873
    %v2875 = vpop.f32.mrb[0].mxu0
    %2876 = vdwg.mxu0
    %2877 = vst [vmem:[#allocation7] sm:$0x3] %v2874
    // Predicated region
    $region74: #{tpu_custom_call.1} parent=1 // pred_check
      _
    $region75: #{tpu_custom_call.1} parent=1 // pred_check_branch
      %2879 = sbr.rel (0) target = $region77
    $region76: #{tpu_custom_call.1} parent=1 // pred_region
      %s2881 = ssub.s32 32, 32
      %2882 = vsyncadd [#allocation4], %s2881
      %s2884 = sshll.u32 [#allocation7], 4
      %s2885 = int_to_ptr.vmem [resolvable:$true] %s2884
      %2887 = dma.vmem_to_hbm [thread:$0]  %s2885, 32, %s16, [#allocation4]
    $region77: #{tpu_custom_call.1} parent=1 // pred_fallthru
      _
    // Predicated region
    $region78: #{tpu_custom_call.1} parent=1 // pred_check
      _
    $region79: #{tpu_custom_call.1} parent=1 // pred_check_branch
      %2889 = sbr.rel (0) target = $region81
    $region80: #{tpu_custom_call.1} parent=1 // pred_region
      %2890 = dma.done [#allocation4], 32
    $region81: #{tpu_custom_call.1} parent=1 // pred_fallthru
      _
    %2891 = vsyncpa [#allocation3], 1
    %2892 = vsyncpa [#allocation6], 1
    %2893 = vsyncpa [#allocation4], 1

</llo_original>
